<compile_context>
chip_gen: v7x
topology: tpu7x:2x2x1
jax: 0.10.0
libtpu: 0.0.40
codegen_flags: <defaults>
</compile_context>

<pallas_src>
import functools

import jax
import jax.numpy as jnp
import numpy as np
from jax.experimental import pallas as pl
from jax.experimental.pallas import tpu as pltpu

DT = 0.1
EPS = 1e-8
T_INIT_STEPS = 10


# ---------------------------------------------------------------------------
# SCF exponential filter as matrices (shared by kernel wrapper and reference):
#   Ca[n,t] = dt/(tau_c+eps) * sum_{s<=t} exp(-(t-s)*alpha) * act[n,s]
#             + init[n] * exp(-t*alpha),   alpha = dt / tau_c
# ---------------------------------------------------------------------------
def _scf_filter_matrices(tau_c, t_lat, dt=DT, eps=EPS):
    alpha = dt / tau_c
    tt = jnp.arange(t_lat, dtype=jnp.float32)
    diff = tt[None, :] - tt[:, None]                       # [s, t] -> t - s
    decay = jnp.exp(-jnp.maximum(diff, 0.0) * alpha)
    dmat = jnp.where(diff >= 0.0, decay, 0.0) * (dt / (tau_c + eps))  # (T,T)
    iexp = jnp.exp(-tt * alpha)[None, :]                              # (1,T)
    return dmat, iexp


# ---------------------------------------------------------------------------
# Fused forward kernel — one grid step per batch element, (neuron, time) tiles
# ---------------------------------------------------------------------------
def worm_vae_kernel(dt, t_init,
                    # inputs
                    odor_ref, ffull_ref, mmask_ref, ftgt_ref, noise_ref,
                    w1t_ref, b1_ref, w2t_ref, b2_ref, smask_ref,
                    winf_ref, binf_ref, wdyn_ref, nparam_ref,
                    dmat_ref, iexp_ref,
                    # outputs
                    mu_ref, logvar_ref, sample_ref,
                    ca_ref, fl_ref, prior_ref,
                    chem_ref, elec_ref, sens_ref, act_ref):
    N = mu_ref.shape[1]
    T_lat = mu_ref.shape[2]
    T_ext = ffull_ref.shape[2]
    K = winf_ref.shape[1] // (3 * N)
    crop = (T_ext - T_lat) // 2

    # packed per-neuron parameters: [deg, tau, bias, wa, ba, scale, shift]
    npar = nparam_ref[...]                                  # (N, 7)
    deg, tau, bias = npar[:, 0:1], npar[:, 1:2], npar[:, 2:3]
    wa, ba = npar[:, 3:4], npar[:, 4:5]
    scale, shift = npar[:, 5:6], npar[:, 6:7]

    # ---- sensory encoder: sensory_in = MLP(odor) * sensory_mask  (N, T_ext) ----
    h = jnp.maximum(
        jnp.dot(w1t_ref[...], odor_ref[0], preferred_element_type=jnp.float32)
        + b1_ref[...], 0.0)
    sensory_ext = (jnp.dot(w2t_ref[...], h, preferred_element_type=jnp.float32)
                   + b2_ref[...]) * smask_ref[...]

    # ---- inference net Q(v|f,o): K-tap valid conv as one im2col matmul ----
    feat = jnp.concatenate([ffull_ref[0], mmask_ref[0], sensory_ext], axis=0)  # (3N, T_ext)
    win = jnp.concatenate([feat[:, k:k + T_lat] for k in range(K)], axis=0)    # (K*3N, T_lat)
    post = (jnp.dot(winf_ref[...], win, preferred_element_type=jnp.float32)
            + binf_ref[...])                                                   # (2N, T_lat)
    mu = post[:N, :]
    logvar = post[N:, :]
    v = mu + jnp.exp(0.5 * logvar) * noise_ref[0]
    mu_ref[0] = mu
    logvar_ref[0] = logvar
    sample_ref[0] = v

    # ---- crop sensory drive to the latent window ----
    sens = sensory_ext[:, crop:crop + T_lat]
    sens_ref[0] = sens

    # ---- generative prior P(v|o): leaky-integrator one-step prediction ----
    # chem/elec matmuls fused through a block-diagonal (2N, 2N) weight.
    z = jnp.concatenate([jnp.tanh(v), v], axis=0)                              # (2N, T_lat)
    zz = jnp.dot(wdyn_ref[...], z, preferred_element_type=jnp.float32)         # (2N, T_lat)
    chem = zz[:N, :]
    elec = zz[N:, :] - deg * v
    chem_ref[0] = chem
    elec_ref[0] = elec
    prior_ref[0] = v + (dt / tau) * (-v + chem + elec + bias + sens)

    # ---- calcium / fluorescence P(f|v,o) ----
    # NeuronWiseAffine -> SCF exponential filter (closed-form triangular matmul)
    # -> NeuronWiseLinear.
    act = jax.nn.softplus(wa * v + ba)                                         # (N, T_lat)
    act_ref[0] = act
    init_ca = ((jnp.mean(ftgt_ref[0, :, :t_init], axis=1, keepdims=True) - shift)
               / (scale + EPS))                                                # (N, 1)
    ca = (jnp.dot(act, dmat_ref[...], preferred_element_type=jnp.float32)
          + init_ca * iexp_ref[...])                                           # (N, T_lat)
    ca_ref[0] = ca
    fl_ref[0] = scale * ca + shift


# ---------------------------------------------------------------------------
# Wrapper: derived filter matrices + BlockSpecs (all tensors kept in (B, N, T))
# ---------------------------------------------------------------------------
def worm_vae_forward(params, fluorescence_full_target, fluorescence_target,
                     missing_target_mask, odor_input, noise):
    B, N, T_ext = fluorescence_full_target.shape
    K = params['w_inf_t'].shape[1] // (3 * N)
    T_lat = T_ext - (K - 1)
    assert T_lat >= T_INIT_STEPS, "latent window shorter than calcium init window"
    assert fluorescence_target.shape == (B, N, T_lat)
    assert noise.shape == (B, N, T_lat)

    # only boundary transpose in the whole forward (tiny odor tensor)
    odor_t = jnp.transpose(odor_input, (0, 2, 1)).astype(jnp.float32)          # (B, D, T_ext)
    D = odor_t.shape[1]
    H = params['w_enc1_t'].shape[0]

    dmat, iexp = _scf_filter_matrices(params['calcium_tau'], T_lat)

    ts_ext = pl.BlockSpec((1, N, T_ext), lambda b: (b, 0, 0))
    ts_lat = pl.BlockSpec((1, N, T_lat), lambda b: (b, 0, 0))

    def fixed(shape):
        return pl.BlockSpec(shape, lambda b: (0, 0))        # grid-invariant weight

    outs = pl.pallas_call(
        functools.partial(worm_vae_kernel, DT, T_INIT_STEPS),
        out_shape=tuple(jax.ShapeDtypeStruct((B, N, T_lat), jnp.float32)
                        for _ in range(10)),
        grid=(B,),
        in_specs=(
            pl.BlockSpec((1, D, T_ext), lambda b: (b, 0, 0)),   # odor (transposed)
            ts_ext, ts_ext,                                     # fluor_full, missing mask
            ts_lat, ts_lat,                                     # fluor_target, noise
            fixed((H, D)), fixed((H, 1)),                       # encoder layer 1
            fixed((N, H)), fixed((N, 1)), fixed((N, 1)),        # encoder layer 2 + mask
            fixed((2 * N, K * 3 * N)), fixed((2 * N, 1)),       # inference conv (im2col)
            fixed((2 * N, 2 * N)),                              # block-diag [Wc; We]
            fixed((N, 7)),                                      # packed per-neuron params
            fixed((T_lat, T_lat)), fixed((1, T_lat)),           # decay matrix, init decay
        ),
        out_specs=(ts_lat,) * 10,
        compiler_params=pltpu.CompilerParams(
            dimension_semantics=("parallel",),
            vmem_limit_bytes=32 * 1024 * 1024),
    )(odor_t, fluorescence_full_target, missing_target_mask,
      fluorescence_target, noise,
      params['w_enc1_t'], params['b_enc1'], params['w_enc2_t'], params['b_enc2'],
      params['sensory_mask'], params['w_inf_t'], params['b_inf'],
      params['w_dyn'], params['neuron_params'], dmat, iexp)

    (v_mu, v_logvar, v_sample, pred_ca, pred_fl, prior_mu,
     chem_in, elec_in, sensory_in, ca_act) = outs
    return {
        'voltage_latent_mu': v_mu,
        'voltage_latent_logvar': v_logvar,
        'voltage_latent_sample': v_sample,
        'pred_calcium_mu': pred_ca,
        'pred_fluorescence_mu': pred_fl,
        'prior_voltage_mu': prior_mu,
        'chem_input': chem_in,
        'elec_input': elec_in,
        'sensory_input': sensory_in,
        'calcium_activation': ca_act,
    }


# ---------------------------------------------------------------------------
# Pure-JAX reference (same math, XLA ops) for correctness verification
# ---------------------------------------------------------------------------
def worm_vae_reference(params, fluor_full, fluor_target, missing_mask,
                       odor_input, noise):
    B, N, T_ext = fluor_full.shape
    K = params['w_inf_t'].shape[1] // (3 * N)
    T_lat = T_ext - (K - 1)
    crop = (T_ext - T_lat) // 2
    hp = jax.lax.Precision.HIGHEST

    odor_t = jnp.transpose(odor_input, (0, 2, 1)).astype(jnp.float32)   # (B, D, T_ext)
    h = jnp.maximum(jnp.einsum('hd,bdt->bht', params['w_enc1_t'], odor_t,
                               precision=hp) + params['b_enc1'][None], 0.0)
    sens_ext = (jnp.einsum('nh,bht->bnt', params['w_enc2_t'], h, precision=hp)
                + params['b_enc2'][None]) * params['sensory_mask'][None]

    feat = jnp.concatenate([fluor_full, missing_mask, sens_ext], axis=1)
    win = jnp.concatenate([feat[:, :, k:k + T_lat] for k in range(K)], axis=1)
    post = (jnp.einsum('ck,bkt->bct', params['w_inf_t'], win, precision=hp)
            + params['b_inf'][None])
    mu, logvar = post[:, :N], post[:, N:]
    v = mu + jnp.exp(0.5 * logvar) * noise
    sens = sens_ext[:, :, crop:crop + T_lat]

    z = jnp.concatenate([jnp.tanh(v), v], axis=1)
    zz = jnp.einsum('cd,bdt->bct', params['w_dyn'], z, precision=hp)
    npar = params['neuron_params']
    deg, tau, bias, wa, ba, scale, shift = [npar[:, i][None, :, None]
                                            for i in range(7)]
    chem = zz[:, :N]
    elec = zz[:, N:] - deg * v
    prior = v + (DT / tau) * (-v + chem + elec + bias + sens)

    act = jax.nn.softplus(wa * v + ba)
    dmat, iexp = _scf_filter_matrices(params['calcium_tau'], T_lat)
    init_ca = ((jnp.mean(fluor_target[:, :, :T_INIT_STEPS], axis=2, keepdims=True)
                - shift) / (scale + EPS))
    ca = jnp.einsum('bnt,ts->bns', act, dmat, precision=hp) + init_ca * iexp[None]
    fl = scale * ca + shift
    return {
        'voltage_latent_mu': mu, 'voltage_latent_logvar': logvar,
        'voltage_latent_sample': v, 'pred_calcium_mu': ca,
        'pred_fluorescence_mu': fl, 'prior_voltage_mu': prior,
        'chem_input': chem, 'elec_input': elec,
        'sensory_input': sens, 'calcium_activation': act,
    }


# ---------------------------------------------------------------------------
# Deterministic synthetic parameters (stored pre-transposed / pre-stacked
# for the (neuron, time) kernel layout)
# ---------------------------------------------------------------------------
def init_params(key, n, d_odor, hidden, ksize):
    ks = jax.random.split(key, 16)
    p = {}
    w1 = jax.random.normal(ks[0], (d_odor, hidden), jnp.float32) * 0.3
    w2 = jax.random.normal(ks[1], (hidden, n), jnp.float32) * 0.3
    p['w_enc1_t'] = w1.T                                        # (H, D)
    p['b_enc1'] = jnp.zeros((hidden, 1), jnp.float32)
    p['w_enc2_t'] = w2.T                                        # (N, H)
    p['b_enc2'] = jnp.zeros((n, 1), jnp.float32)
    p['sensory_mask'] = jnp.zeros((n, 1), jnp.float32).at[: n // 2].set(1.0)

    w_inf = jax.random.normal(ks[2], (ksize, 3 * n, 2 * n), jnp.float32) * 0.05
    # im2col weight: columns ordered [tap0 chans | tap1 chans | ...]
    p['w_inf_t'] = jnp.transpose(w_inf, (2, 0, 1)).reshape(2 * n, ksize * 3 * n)
    p['b_inf'] = jnp.zeros((2 * n, 1), jnp.float32)

    sparsity_c = (jax.random.uniform(ks[3], (n, n)) < 0.3).astype(jnp.float32)
    signs_c = jnp.where(jax.random.uniform(ks[4], (n, n)) < 0.7, 1.0, -1.0)
    mags_c = jax.random.uniform(ks[5], (n, n)) * 0.2
    w_chem = sparsity_c * signs_c * mags_c
    sparsity_e = (jax.random.uniform(ks[6], (n, n)) < 0.2).astype(jnp.float32)
    sparsity_e = jnp.maximum(sparsity_e, sparsity_e.T)
    w_elec = sparsity_e * (jax.random.uniform(ks[7], (n, n)) * 0.1)
    w_dyn = jnp.zeros((2 * n, 2 * n), jnp.float32)
    w_dyn = w_dyn.at[:n, :n].set(w_chem).at[n:, n:].set(w_elec)
    p['w_dyn'] = w_dyn                                          # block-diag [Wc, We]

    deg = jnp.sum(w_elec, axis=1)                               # electrical degree
    tau = 0.5 + jax.random.uniform(ks[8], (n,))
    bias = jax.random.normal(ks[9], (n,)) * 0.1
    wa = 1.0 + 0.1 * jax.random.normal(ks[10], (n,))
    ba = 0.1 * jax.random.normal(ks[11], (n,))
    scale = 0.5 + jax.random.uniform(ks[12], (n,))
    shift = 0.1 * jax.random.normal(ks[13], (n,))
    # packed per-neuron parameters: [deg, tau, bias, wa, ba, scale, shift]
    p['neuron_params'] = jnp.stack([deg, tau, bias, wa, ba, scale, shift],
                                   axis=1).astype(jnp.float32)  # (N, 7)
    p['calcium_tau'] = jax.random.uniform(ks[14], ())            # torch.rand(1) analogue
    return p


if __name__ == "__main__":
    N, T_EXT, B, D_ODOR, HID, K = 16, 24, 2, 4, 32, 9
    key = jax.random.PRNGKey(0)
    k_par, k_f, k_m, k_o, k_n = jax.random.split(key, 5)

    params = init_params(k_par, N, D_ODOR, HID, K)
    T_LAT = T_EXT - (K - 1)
    crop = (T_EXT - T_LAT) // 2

    fluor_full = 1.0 + 0.5 * jax.random.normal(k_f, (B, N, T_EXT), jnp.float32)
    missing_mask = (jax.random.uniform(k_m, (B, N, T_EXT)) > 0.1).astype(jnp.float32)
    fluor_target = fluor_full[:, :, crop:T_EXT - crop]                   # (B, N, T_LAT)
    odor_input = jax.random.normal(k_o, (B, T_EXT, D_ODOR), jnp.float32)
    noise = jax.random.normal(k_n, (B, N, T_LAT), jnp.float32)

    outputs = jax.jit(worm_vae_forward)(params, fluor_full, fluor_target,
                                        missing_mask, odor_input, noise)
    jax.block_until_ready(outputs)

    reference = jax.jit(worm_vae_reference)(params, fluor_full, fluor_target,
                                            missing_mask, odor_input, noise)
    jax.block_until_ready(reference)

    names = ('voltage_latent_mu', 'voltage_latent_logvar', 'voltage_latent_sample',
             'prior_voltage_mu', 'pred_calcium_mu', 'pred_fluorescence_mu',
             'chem_input', 'elec_input', 'sensory_input', 'calcium_activation')
    for name in names:
        assert outputs[name].shape == (B, N, T_LAT), name
        assert bool(jnp.all(jnp.isfinite(outputs[name]))), name
        np.testing.assert_allclose(np.asarray(outputs[name]),
                                   np.asarray(reference[name]),
                                   rtol=2e-2, atol=2e-2, err_msg=name)
    print("KERNEL_OK")
</pallas_src>

<mosaic_0001>
module attributes {stable_mosaic.version = 11 : i64} {
  func.func @worm_vae_kernel(%arg0: i32, %arg1: memref<1x4x24xf32, #tpu.memory_space<vmem>>, %arg2: memref<1x16x24xf32, #tpu.memory_space<vmem>>, %arg3: memref<1x16x24xf32, #tpu.memory_space<vmem>>, %arg4: memref<1x16x16xf32, #tpu.memory_space<vmem>>, %arg5: memref<1x16x16xf32, #tpu.memory_space<vmem>>, %arg6: memref<32x4xf32, #tpu.memory_space<vmem>>, %arg7: memref<32x1xf32, #tpu.memory_space<vmem>>, %arg8: memref<16x32xf32, #tpu.memory_space<vmem>>, %arg9: memref<16x1xf32, #tpu.memory_space<vmem>>, %arg10: memref<16x1xf32, #tpu.memory_space<vmem>>, %arg11: memref<32x432xf32, #tpu.memory_space<vmem>>, %arg12: memref<32x1xf32, #tpu.memory_space<vmem>>, %arg13: memref<32x32xf32, #tpu.memory_space<vmem>>, %arg14: memref<16x7xf32, #tpu.memory_space<vmem>>, %arg15: memref<16x16xf32, #tpu.memory_space<vmem>>, %arg16: memref<1x16xf32, #tpu.memory_space<vmem>>, %arg17: memref<1x16x16xf32, #tpu.memory_space<vmem>>, %arg18: memref<1x16x16xf32, #tpu.memory_space<vmem>>, %arg19: memref<1x16x16xf32, #tpu.memory_space<vmem>>, %arg20: memref<1x16x16xf32, #tpu.memory_space<vmem>>, %arg21: memref<1x16x16xf32, #tpu.memory_space<vmem>>, %arg22: memref<1x16x16xf32, #tpu.memory_space<vmem>>, %arg23: memref<1x16x16xf32, #tpu.memory_space<vmem>>, %arg24: memref<1x16x16xf32, #tpu.memory_space<vmem>>, %arg25: memref<1x16x16xf32, #tpu.memory_space<vmem>>, %arg26: memref<1x16x16xf32, #tpu.memory_space<vmem>>) attributes {dimension_semantics = [#tpu.dimension_semantics<parallel>], iteration_bounds = array<i64: 2>, scalar_prefetch = 0 : i64, scratch_operands = 0 : i64, tpu.core_type = #tpu.core_type<tc>, window_params = [{transform_indices = @transform_0, window_bounds = array<i64: 1, 4, 24>}, {transform_indices = @transform_1, window_bounds = array<i64: 1, 16, 24>}, {transform_indices = @transform_2, window_bounds = array<i64: 1, 16, 24>}, {transform_indices = @transform_3, window_bounds = array<i64: 1, 16, 16>}, {transform_indices = @transform_4, window_bounds = array<i64: 1, 16, 16>}, {pipeline_mode = #tpu.pipeline_mode<synchronous>, transform_indices = @transform_5, window_bounds = array<i64: 32, 4>}, {pipeline_mode = #tpu.pipeline_mode<synchronous>, transform_indices = @transform_6, window_bounds = array<i64: 32, 1>}, {pipeline_mode = #tpu.pipeline_mode<synchronous>, transform_indices = @transform_7, window_bounds = array<i64: 16, 32>}, {pipeline_mode = #tpu.pipeline_mode<synchronous>, transform_indices = @transform_8, window_bounds = array<i64: 16, 1>}, {pipeline_mode = #tpu.pipeline_mode<synchronous>, transform_indices = @transform_9, window_bounds = array<i64: 16, 1>}, {pipeline_mode = #tpu.pipeline_mode<synchronous>, transform_indices = @transform_10, window_bounds = array<i64: 32, 432>}, {pipeline_mode = #tpu.pipeline_mode<synchronous>, transform_indices = @transform_11, window_bounds = array<i64: 32, 1>}, {pipeline_mode = #tpu.pipeline_mode<synchronous>, transform_indices = @transform_12, window_bounds = array<i64: 32, 32>}, {pipeline_mode = #tpu.pipeline_mode<synchronous>, transform_indices = @transform_13, window_bounds = array<i64: 16, 7>}, {pipeline_mode = #tpu.pipeline_mode<synchronous>, transform_indices = @transform_14, window_bounds = array<i64: 16, 16>}, {pipeline_mode = #tpu.pipeline_mode<synchronous>, transform_indices = @transform_15, window_bounds = array<i64: 1, 16>}, {transform_indices = @transform_16, window_bounds = array<i64: 1, 16, 16>}, {transform_indices = @transform_17, window_bounds = array<i64: 1, 16, 16>}, {transform_indices = @transform_18, window_bounds = array<i64: 1, 16, 16>}, {transform_indices = @transform_19, window_bounds = array<i64: 1, 16, 16>}, {transform_indices = @transform_20, window_bounds = array<i64: 1, 16, 16>}, {transform_indices = @transform_21, window_bounds = array<i64: 1, 16, 16>}, {transform_indices = @transform_22, window_bounds = array<i64: 1, 16, 16>}, {transform_indices = @transform_23, window_bounds = array<i64: 1, 16, 16>}, {transform_indices = @transform_24, window_bounds = array<i64: 1, 16, 16>}, {transform_indices = @transform_25, window_bounds = array<i64: 1, 16, 16>}]} {
    %c0 = arith.constant 0 : index
    %c0_0 = arith.constant 0 : index
    %0 = vector.load %arg14[%c0, %c0_0] : memref<16x7xf32, #tpu.memory_space<vmem>>, vector<16x7xf32>
    %1 = vector.extract_strided_slice %0 {offsets = [0, 0], sizes = [16, 1], strides = [1, 1]} : vector<16x7xf32> to vector<16x1xf32>
    %2 = vector.extract_strided_slice %0 {offsets = [0, 1], sizes = [16, 1], strides = [1, 1]} : vector<16x7xf32> to vector<16x1xf32>
    %3 = vector.extract_strided_slice %0 {offsets = [0, 2], sizes = [16, 1], strides = [1, 1]} : vector<16x7xf32> to vector<16x1xf32>
    %4 = vector.extract_strided_slice %0 {offsets = [0, 3], sizes = [16, 1], strides = [1, 1]} : vector<16x7xf32> to vector<16x1xf32>
    %5 = vector.extract_strided_slice %0 {offsets = [0, 4], sizes = [16, 1], strides = [1, 1]} : vector<16x7xf32> to vector<16x1xf32>
    %6 = vector.extract_strided_slice %0 {offsets = [0, 5], sizes = [16, 1], strides = [1, 1]} : vector<16x7xf32> to vector<16x1xf32>
    %7 = vector.extract_strided_slice %0 {offsets = [0, 6], sizes = [16, 1], strides = [1, 1]} : vector<16x7xf32> to vector<16x1xf32>
    %c0_1 = arith.constant 0 : index
    %c0_2 = arith.constant 0 : index
    %8 = vector.load %arg6[%c0_1, %c0_2] : memref<32x4xf32, #tpu.memory_space<vmem>>, vector<32x4xf32>
    %c0_3 = arith.constant 0 : index
    %c0_4 = arith.constant 0 : index
    %c0_5 = arith.constant 0 : index
    %9 = vector.load %arg1[%c0_3, %c0_4, %c0_5] : memref<1x4x24xf32, #tpu.memory_space<vmem>>, vector<1x4x24xf32>
    %10 = vector.shape_cast %9 : vector<1x4x24xf32> to vector<4x24xf32>
    %cst = arith.constant dense<0.000000e+00> : vector<32x24xf32>
    %11 = tpu.matmul %8, %10, %cst {dimension_numbers = #tpu.dot_dimension_numbers<[1], [0], [0], [1], [0, 0, 1, 1], [], []>} : vector<32x4xf32>, vector<4x24xf32>, vector<32x24xf32> -> vector<32x24xf32>
    %c0_6 = arith.constant 0 : index
    %c0_7 = arith.constant 0 : index
    %12 = vector.load %arg7[%c0_6, %c0_7] : memref<32x1xf32, #tpu.memory_space<vmem>>, vector<32x1xf32>
    %13 = vector.broadcast %12 : vector<32x1xf32> to vector<32x24xf32>
    %14 = arith.addf %11, %13 : vector<32x24xf32>
    %cst_8 = arith.constant 0.000000e+00 : f32
    %15 = vector.broadcast %cst_8 : f32 to vector<32x24xf32>
    %16 = arith.maximumf %14, %15 : vector<32x24xf32>
    %c0_9 = arith.constant 0 : index
    %c0_10 = arith.constant 0 : index
    %17 = vector.load %arg8[%c0_9, %c0_10] : memref<16x32xf32, #tpu.memory_space<vmem>>, vector<16x32xf32>
    %cst_11 = arith.constant dense<0.000000e+00> : vector<16x24xf32>
    %18 = tpu.matmul %17, %16, %cst_11 {dimension_numbers = #tpu.dot_dimension_numbers<[1], [0], [0], [1], [0, 0, 1, 1], [], []>} : vector<16x32xf32>, vector<32x24xf32>, vector<16x24xf32> -> vector<16x24xf32>
    %c0_12 = arith.constant 0 : index
    %c0_13 = arith.constant 0 : index
    %19 = vector.load %arg9[%c0_12, %c0_13] : memref<16x1xf32, #tpu.memory_space<vmem>>, vector<16x1xf32>
    %20 = vector.broadcast %19 : vector<16x1xf32> to vector<16x24xf32>
    %21 = arith.addf %18, %20 : vector<16x24xf32>
    %c0_14 = arith.constant 0 : index
    %c0_15 = arith.constant 0 : index
    %22 = vector.load %arg10[%c0_14, %c0_15] : memref<16x1xf32, #tpu.memory_space<vmem>>, vector<16x1xf32>
    %23 = vector.broadcast %22 : vector<16x1xf32> to vector<16x24xf32>
    %24 = arith.mulf %21, %23 : vector<16x24xf32>
    %c0_16 = arith.constant 0 : index
    %c0_17 = arith.constant 0 : index
    %c0_18 = arith.constant 0 : index
    %25 = vector.load %arg2[%c0_16, %c0_17, %c0_18] : memref<1x16x24xf32, #tpu.memory_space<vmem>>, vector<1x16x24xf32>
    %26 = vector.shape_cast %25 : vector<1x16x24xf32> to vector<16x24xf32>
    %c0_19 = arith.constant 0 : index
    %c0_20 = arith.constant 0 : index
    %c0_21 = arith.constant 0 : index
    %27 = vector.load %arg3[%c0_19, %c0_20, %c0_21] : memref<1x16x24xf32, #tpu.memory_space<vmem>>, vector<1x16x24xf32>
    %28 = vector.shape_cast %27 : vector<1x16x24xf32> to vector<16x24xf32>
    %29 = tpu.concatenate %26, %28, %24 in 0 : vector<16x24xf32>, vector<16x24xf32>, vector<16x24xf32> -> vector<48x24xf32>
    %30 = vector.extract_strided_slice %29 {offsets = [0, 0], sizes = [48, 16], strides = [1, 1]} : vector<48x24xf32> to vector<48x16xf32>
    %31 = vector.extract_strided_slice %29 {offsets = [0, 1], sizes = [48, 16], strides = [1, 1]} : vector<48x24xf32> to vector<48x16xf32>
    %32 = vector.extract_strided_slice %29 {offsets = [0, 2], sizes = [48, 16], strides = [1, 1]} : vector<48x24xf32> to vector<48x16xf32>
    %33 = vector.extract_strided_slice %29 {offsets = [0, 3], sizes = [48, 16], strides = [1, 1]} : vector<48x24xf32> to vector<48x16xf32>
    %34 = vector.extract_strided_slice %29 {offsets = [0, 4], sizes = [48, 16], strides = [1, 1]} : vector<48x24xf32> to vector<48x16xf32>
    %35 = vector.extract_strided_slice %29 {offsets = [0, 5], sizes = [48, 16], strides = [1, 1]} : vector<48x24xf32> to vector<48x16xf32>
    %36 = vector.extract_strided_slice %29 {offsets = [0, 6], sizes = [48, 16], strides = [1, 1]} : vector<48x24xf32> to vector<48x16xf32>
    %37 = vector.extract_strided_slice %29 {offsets = [0, 7], sizes = [48, 16], strides = [1, 1]} : vector<48x24xf32> to vector<48x16xf32>
    %38 = vector.extract_strided_slice %29 {offsets = [0, 8], sizes = [48, 16], strides = [1, 1]} : vector<48x24xf32> to vector<48x16xf32>
    %39 = tpu.concatenate %30, %31, %32, %33, %34, %35, %36, %37, %38 in 0 : vector<48x16xf32>, vector<48x16xf32>, vector<48x16xf32>, vector<48x16xf32>, vector<48x16xf32>, vector<48x16xf32>, vector<48x16xf32>, vector<48x16xf32>, vector<48x16xf32> -> vector<432x16xf32>
    %c0_22 = arith.constant 0 : index
    %c0_23 = arith.constant 0 : index
    %40 = vector.load %arg11[%c0_22, %c0_23] : memref<32x432xf32, #tpu.memory_space<vmem>>, vector<32x432xf32>
    %cst_24 = arith.constant dense<0.000000e+00> : vector<32x16xf32>
    %41 = tpu.matmul %40, %39, %cst_24 {dimension_numbers = #tpu.dot_dimension_numbers<[1], [0], [0], [1], [0, 0, 1, 1], [], []>} : vector<32x432xf32>, vector<432x16xf32>, vector<32x16xf32> -> vector<32x16xf32>
    %c0_25 = arith.constant 0 : index
    %c0_26 = arith.constant 0 : index
    %42 = vector.load %arg12[%c0_25, %c0_26] : memref<32x1xf32, #tpu.memory_space<vmem>>, vector<32x1xf32>
    %43 = vector.broadcast %42 : vector<32x1xf32> to vector<32x16xf32>
    %44 = arith.addf %41, %43 : vector<32x16xf32>
    %45 = vector.extract_strided_slice %44 {offsets = [0, 0], sizes = [16, 16], strides = [1, 1]} : vector<32x16xf32> to vector<16x16xf32>
    %46 = vector.extract_strided_slice %44 {offsets = [16, 0], sizes = [16, 16], strides = [1, 1]} : vector<32x16xf32> to vector<16x16xf32>
    %cst_27 = arith.constant 5.000000e-01 : f32
    %47 = vector.broadcast %cst_27 : f32 to vector<16x16xf32>
    %48 = arith.mulf %47, %46 : vector<16x16xf32>
    %49 = math.exp %48 : vector<16x16xf32>
    %c0_28 = arith.constant 0 : index
    %c0_29 = arith.constant 0 : index
    %c0_30 = arith.constant 0 : index
    %50 = vector.load %arg5[%c0_28, %c0_29, %c0_30] : memref<1x16x16xf32, #tpu.memory_space<vmem>>, vector<1x16x16xf32>
    %51 = vector.shape_cast %50 : vector<1x16x16xf32> to vector<16x16xf32>
    %52 = arith.mulf %49, %51 : vector<16x16xf32>
    %53 = arith.addf %45, %52 : vector<16x16xf32>
    %c0_31 = arith.constant 0 : index
    %c0_32 = arith.constant 0 : index
    %c0_33 = arith.constant 0 : index
    %54 = vector.load %arg17[%c0_31, %c0_32, %c0_33] : memref<1x16x16xf32, #tpu.memory_space<vmem>>, vector<1x16x16xf32>
    %55 = vector.shape_cast %54 : vector<1x16x16xf32> to vector<16x16xf32>
    %56 = vector.shape_cast %45 : vector<16x16xf32> to vector<1x16x16xf32>
    tpu.vector_store %arg17[%c0_31, %c0_32, %c0_33], %56 {strides = array<i32>} : memref<1x16x16xf32, #tpu.memory_space<vmem>>, vector<1x16x16xf32>,
    %c0_34 = arith.constant 0 : index
    %c0_35 = arith.constant 0 : index
    %c0_36 = arith.constant 0 : index
    %57 = vector.load %arg18[%c0_34, %c0_35, %c0_36] : memref<1x16x16xf32, #tpu.memory_space<vmem>>, vector<1x16x16xf32>
    %58 = vector.shape_cast %57 : vector<1x16x16xf32> to vector<16x16xf32>
    %59 = vector.shape_cast %46 : vector<16x16xf32> to vector<1x16x16xf32>
    tpu.vector_store %arg18[%c0_34, %c0_35, %c0_36], %59 {strides = array<i32>} : memref<1x16x16xf32, #tpu.memory_space<vmem>>, vector<1x16x16xf32>,
    %c0_37 = arith.constant 0 : index
    %c0_38 = arith.constant 0 : index
    %c0_39 = arith.constant 0 : index
    %60 = vector.load %arg19[%c0_37, %c0_38, %c0_39] : memref<1x16x16xf32, #tpu.memory_space<vmem>>, vector<1x16x16xf32>
    %61 = vector.shape_cast %60 : vector<1x16x16xf32> to vector<16x16xf32>
    %62 = vector.shape_cast %53 : vector<16x16xf32> to vector<1x16x16xf32>
    tpu.vector_store %arg19[%c0_37, %c0_38, %c0_39], %62 {strides = array<i32>} : memref<1x16x16xf32, #tpu.memory_space<vmem>>, vector<1x16x16xf32>,
    %63 = vector.extract_strided_slice %24 {offsets = [0, 4], sizes = [16, 16], strides = [1, 1]} : vector<16x24xf32> to vector<16x16xf32>
    %c0_40 = arith.constant 0 : index
    %c0_41 = arith.constant 0 : index
    %c0_42 = arith.constant 0 : index
    %64 = vector.load %arg25[%c0_40, %c0_41, %c0_42] : memref<1x16x16xf32, #tpu.memory_space<vmem>>, vector<1x16x16xf32>
    %65 = vector.shape_cast %64 : vector<1x16x16xf32> to vector<16x16xf32>
    %66 = vector.shape_cast %63 : vector<16x16xf32> to vector<1x16x16xf32>
    tpu.vector_store %arg25[%c0_40, %c0_41, %c0_42], %66 {strides = array<i32>} : memref<1x16x16xf32, #tpu.memory_space<vmem>>, vector<1x16x16xf32>,
    %67 = math.tanh %53 : vector<16x16xf32>
    %68 = tpu.concatenate %67, %53 in 0 : vector<16x16xf32>, vector<16x16xf32> -> vector<32x16xf32>
    %c0_43 = arith.constant 0 : index
    %c0_44 = arith.constant 0 : index
    %69 = vector.load %arg13[%c0_43, %c0_44] : memref<32x32xf32, #tpu.memory_space<vmem>>, vector<32x32xf32>
    %cst_45 = arith.constant dense<0.000000e+00> : vector<32x16xf32>
    %70 = tpu.matmul %69, %68, %cst_45 {dimension_numbers = #tpu.dot_dimension_numbers<[1], [0], [0], [1], [0, 0, 1, 1], [], []>} : vector<32x32xf32>, vector<32x16xf32>, vector<32x16xf32> -> vector<32x16xf32>
    %71 = vector.extract_strided_slice %70 {offsets = [0, 0], sizes = [16, 16], strides = [1, 1]} : vector<32x16xf32> to vector<16x16xf32>
    %72 = vector.extract_strided_slice %70 {offsets = [16, 0], sizes = [16, 16], strides = [1, 1]} : vector<32x16xf32> to vector<16x16xf32>
    %73 = vector.broadcast %1 : vector<16x1xf32> to vector<16x16xf32>
    %74 = arith.mulf %73, %53 : vector<16x16xf32>
    %75 = arith.subf %72, %74 : vector<16x16xf32>
    %c0_46 = arith.constant 0 : index
    %c0_47 = arith.constant 0 : index
    %c0_48 = arith.constant 0 : index
    %76 = vector.load %arg23[%c0_46, %c0_47, %c0_48] : memref<1x16x16xf32, #tpu.memory_space<vmem>>, vector<1x16x16xf32>
    %77 = vector.shape_cast %76 : vector<1x16x16xf32> to vector<16x16xf32>
    %78 = vector.shape_cast %71 : vector<16x16xf32> to vector<1x16x16xf32>
    tpu.vector_store %arg23[%c0_46, %c0_47, %c0_48], %78 {strides = array<i32>} : memref<1x16x16xf32, #tpu.memory_space<vmem>>, vector<1x16x16xf32>,
    %c0_49 = arith.constant 0 : index
    %c0_50 = arith.constant 0 : index
    %c0_51 = arith.constant 0 : index
    %79 = vector.load %arg24[%c0_49, %c0_50, %c0_51] : memref<1x16x16xf32, #tpu.memory_space<vmem>>, vector<1x16x16xf32>
    %80 = vector.shape_cast %79 : vector<1x16x16xf32> to vector<16x16xf32>
    %81 = vector.shape_cast %75 : vector<16x16xf32> to vector<1x16x16xf32>
    tpu.vector_store %arg24[%c0_49, %c0_50, %c0_51], %81 {strides = array<i32>} : memref<1x16x16xf32, #tpu.memory_space<vmem>>, vector<1x16x16xf32>,
    %cst_52 = arith.constant 1.000000e-01 : f32
    %82 = vector.broadcast %cst_52 : f32 to vector<16x1xf32>
    %83 = arith.divf %82, %2 : vector<16x1xf32>
    %cst_53 = arith.constant 0.000000e+00 : f32
    %84 = vector.broadcast %cst_53 : f32 to vector<16x16xf32>
    %85 = arith.subf %84, %53 : vector<16x16xf32>
    %86 = arith.addf %85, %71 : vector<16x16xf32>
    %87 = arith.addf %86, %75 : vector<16x16xf32>
    %88 = vector.broadcast %3 : vector<16x1xf32> to vector<16x16xf32>
    %89 = arith.addf %87, %88 : vector<16x16xf32>
    %90 = arith.addf %89, %63 : vector<16x16xf32>
    %91 = vector.broadcast %83 : vector<16x1xf32> to vector<16x16xf32>
    %92 = arith.mulf %91, %90 : vector<16x16xf32>
    %93 = arith.addf %53, %92 : vector<16x16xf32>
    %c0_54 = arith.constant 0 : index
    %c0_55 = arith.constant 0 : index
    %c0_56 = arith.constant 0 : index
    %94 = vector.load %arg22[%c0_54, %c0_55, %c0_56] : memref<1x16x16xf32, #tpu.memory_space<vmem>>, vector<1x16x16xf32>
    %95 = vector.shape_cast %94 : vector<1x16x16xf32> to vector<16x16xf32>
    %96 = vector.shape_cast %93 : vector<16x16xf32> to vector<1x16x16xf32>
    tpu.vector_store %arg22[%c0_54, %c0_55, %c0_56], %96 {strides = array<i32>} : memref<1x16x16xf32, #tpu.memory_space<vmem>>, vector<1x16x16xf32>,
    %97 = vector.broadcast %4 : vector<16x1xf32> to vector<16x16xf32>
    %98 = arith.mulf %97, %53 : vector<16x16xf32>
    %99 = vector.broadcast %5 : vector<16x1xf32> to vector<16x16xf32>
    %100 = arith.addf %98, %99 : vector<16x16xf32>
    %cst_57 = arith.constant 0.000000e+00 : f32
    %101 = vector.broadcast %cst_57 : f32 to vector<16x16xf32>
    %102 = arith.maximumf %100, %101 : vector<16x16xf32>
    %103 = vector.broadcast %cst_57 : f32 to vector<16x16xf32>
    %104 = arith.subf %100, %103 : vector<16x16xf32>
    %105 = arith.cmpf one, %104, %104 : vector<16x16xf32>
    %106 = vector.broadcast %cst_57 : f32 to vector<16x16xf32>
    %107 = arith.addf %100, %106 : vector<16x16xf32>
    %108 = math.absf %104 : vector<16x16xf32>
    %cst_58 = arith.constant 0.000000e+00 : f32
    %109 = vector.broadcast %cst_58 : f32 to vector<16x16xf32>
    %110 = arith.subf %109, %108 : vector<16x16xf32>
    %111 = math.exp %110 : vector<16x16xf32>
    %112 = math.log1p %111 : vector<16x16xf32>
    %113 = arith.addf %102, %112 : vector<16x16xf32>
    %114 = arith.select %105, %107, %113 : vector<16x16xi1>, vector<16x16xf32>
    %c0_59 = arith.constant 0 : index
    %c0_60 = arith.constant 0 : index
    %c0_61 = arith.constant 0 : index
    %115 = vector.load %arg26[%c0_59, %c0_60, %c0_61] : memref<1x16x16xf32, #tpu.memory_space<vmem>>, vector<1x16x16xf32>
    %116 = vector.shape_cast %115 : vector<1x16x16xf32> to vector<16x16xf32>
    %117 = vector.shape_cast %114 : vector<16x16xf32> to vector<1x16x16xf32>
    tpu.vector_store %arg26[%c0_59, %c0_60, %c0_61], %117 {strides = array<i32>} : memref<1x16x16xf32, #tpu.memory_space<vmem>>, vector<1x16x16xf32>,
    %c0_62 = arith.constant 0 : index
    %c0_63 = arith.constant 0 : index
    %c0_64 = arith.constant 0 : index
    %118 = vector.load %arg4[%c0_62, %c0_63, %c0_64] : memref<1x16x16xf32, #tpu.memory_space<vmem>>, vector<1x16x10xf32>
    %119 = vector.shape_cast %118 : vector<1x16x10xf32> to vector<16x10xf32>
    %cst_65 = arith.constant dense<0.000000e+00> : vector<16xf32>
    %120 = vector.multi_reduction <add>, %119, %cst_65 [1] : vector<16x10xf32> to vector<16xf32>
    %121 = vector.shape_cast %120 : vector<16xf32> to vector<16x1xf32>
    %cst_66 = arith.constant 1.000000e+01 : f32
    %122 = vector.broadcast %cst_66 : f32 to vector<16x1xf32>
    %123 = arith.divf %121, %122 : vector<16x1xf32>
    %124 = arith.subf %123, %7 : vector<16x1xf32>
    %cst_67 = arith.constant 9.99999993E-9 : f32
    %125 = vector.broadcast %cst_67 : f32 to vector<16x1xf32>
    %126 = arith.addf %6, %125 : vector<16x1xf32>
    %127 = arith.divf %124, %126 : vector<16x1xf32>
    %c0_68 = arith.constant 0 : index
    %c0_69 = arith.constant 0 : index
    %128 = vector.load %arg15[%c0_68, %c0_69] : memref<16x16xf32, #tpu.memory_space<vmem>>, vector<16x16xf32>
    %cst_70 = arith.constant dense<0.000000e+00> : vector<16x16xf32>
    %129 = tpu.matmul %114, %128, %cst_70 {dimension_numbers = #tpu.dot_dimension_numbers<[1], [0], [0], [1], [0, 0, 1, 1], [], []>} : vector<16x16xf32>, vector<16x16xf32>, vector<16x16xf32> -> vector<16x16xf32>
    %c0_71 = arith.constant 0 : index
    %c0_72 = arith.constant 0 : index
    %130 = vector.load %arg16[%c0_71, %c0_72] : memref<1x16xf32, #tpu.memory_space<vmem>>, vector<1x16xf32>
    %131 = vector.broadcast %127 : vector<16x1xf32> to vector<16x16xf32>
    %132 = vector.broadcast %130 : vector<1x16xf32> to vector<16x16xf32>
    %133 = arith.mulf %131, %132 : vector<16x16xf32>
    %134 = arith.addf %129, %133 : vector<16x16xf32>
    %c0_73 = arith.constant 0 : index
    %c0_74 = arith.constant 0 : index
    %c0_75 = arith.constant 0 : index
    %135 = vector.load %arg20[%c0_73, %c0_74, %c0_75] : memref<1x16x16xf32, #tpu.memory_space<vmem>>, vector<1x16x16xf32>
    %136 = vector.shape_cast %135 : vector<1x16x16xf32> to vector<16x16xf32>
    %137 = vector.shape_cast %134 : vector<16x16xf32> to vector<1x16x16xf32>
    tpu.vector_store %arg20[%c0_73, %c0_74, %c0_75], %137 {strides = array<i32>} : memref<1x16x16xf32, #tpu.memory_space<vmem>>, vector<1x16x16xf32>,
    %138 = vector.broadcast %6 : vector<16x1xf32> to vector<16x16xf32>
    %139 = arith.mulf %138, %134 : vector<16x16xf32>
    %140 = vector.broadcast %7 : vector<16x1xf32> to vector<16x16xf32>
    %141 = arith.addf %139, %140 : vector<16x16xf32>
    %c0_76 = arith.constant 0 : index
    %c0_77 = arith.constant 0 : index
    %c0_78 = arith.constant 0 : index
    %142 = vector.load %arg21[%c0_76, %c0_77, %c0_78] : memref<1x16x16xf32, #tpu.memory_space<vmem>>, vector<1x16x16xf32>
    %143 = vector.shape_cast %142 : vector<1x16x16xf32> to vector<16x16xf32>
    %144 = vector.shape_cast %141 : vector<16x16xf32> to vector<1x16x16xf32>
    tpu.vector_store %arg21[%c0_76, %c0_77, %c0_78], %144 {strides = array<i32>} : memref<1x16x16xf32, #tpu.memory_space<vmem>>, vector<1x16x16xf32>,
    return
  }
  func.func @transform_0(%arg0: i32) -> (i32, i32, i32) {
    %c0_i32 = arith.constant 0 : i32
    %c0_i32_0 = arith.constant 0 : i32
    %c0_i32_1 = arith.constant 0 : i32
    return %arg0, %c0_i32, %c0_i32_0 : i32, i32, i32
  }
  func.func @transform_1(%arg0: i32) -> (i32, i32, i32) {
    %c0_i32 = arith.constant 0 : i32
    %c0_i32_0 = arith.constant 0 : i32
    %c0_i32_1 = arith.constant 0 : i32
    return %arg0, %c0_i32, %c0_i32_0 : i32, i32, i32
  }
  func.func @transform_2(%arg0: i32) -> (i32, i32, i32) {
    %c0_i32 = arith.constant 0 : i32
    %c0_i32_0 = arith.constant 0 : i32
    %c0_i32_1 = arith.constant 0 : i32
    return %arg0, %c0_i32, %c0_i32_0 : i32, i32, i32
  }
  func.func @transform_3(%arg0: i32) -> (i32, i32, i32) {
    %c0_i32 = arith.constant 0 : i32
    %c0_i32_0 = arith.constant 0 : i32
    %c0_i32_1 = arith.constant 0 : i32
    return %arg0, %c0_i32, %c0_i32_0 : i32, i32, i32
  }
  func.func @transform_4(%arg0: i32) -> (i32, i32, i32) {
    %c0_i32 = arith.constant 0 : i32
    %c0_i32_0 = arith.constant 0 : i32
    %c0_i32_1 = arith.constant 0 : i32
    return %arg0, %c0_i32, %c0_i32_0 : i32, i32, i32
  }
  func.func @transform_5(%arg0: i32) -> (i32, i32) {
    %c0_i32 = arith.constant 0 : i32
    %c0_i32_0 = arith.constant 0 : i32
    %c0_i32_1 = arith.constant 0 : i32
    return %c0_i32, %c0_i32_0 : i32, i32
  }
  func.func @transform_6(%arg0: i32) -> (i32, i32) {
    %c0_i32 = arith.constant 0 : i32
    %c0_i32_0 = arith.constant 0 : i32
    %c0_i32_1 = arith.constant 0 : i32
    return %c0_i32, %c0_i32_0 : i32, i32
  }
  func.func @transform_7(%arg0: i32) -> (i32, i32) {
    %c0_i32 = arith.constant 0 : i32
    %c0_i32_0 = arith.constant 0 : i32
    %c0_i32_1 = arith.constant 0 : i32
    return %c0_i32, %c0_i32_0 : i32, i32
  }
  func.func @transform_8(%arg0: i32) -> (i32, i32) {
    %c0_i32 = arith.constant 0 : i32
    %c0_i32_0 = arith.constant 0 : i32
    %c0_i32_1 = arith.constant 0 : i32
    return %c0_i32, %c0_i32_0 : i32, i32
  }
  func.func @transform_9(%arg0: i32) -> (i32, i32) {
    %c0_i32 = arith.constant 0 : i32
    %c0_i32_0 = arith.constant 0 : i32
    %c0_i32_1 = arith.constant 0 : i32
    return %c0_i32, %c0_i32_0 : i32, i32
  }
  func.func @transform_10(%arg0: i32) -> (i32, i32) {
    %c0_i32 = arith.constant 0 : i32
    %c0_i32_0 = arith.constant 0 : i32
    %c0_i32_1 = arith.constant 0 : i32
    return %c0_i32, %c0_i32_0 : i32, i32
  }
  func.func @transform_11(%arg0: i32) -> (i32, i32) {
    %c0_i32 = arith.constant 0 : i32
    %c0_i32_0 = arith.constant 0 : i32
    %c0_i32_1 = arith.constant 0 : i32
    return %c0_i32, %c0_i32_0 : i32, i32
  }
  func.func @transform_12(%arg0: i32) -> (i32, i32) {
    %c0_i32 = arith.constant 0 : i32
    %c0_i32_0 = arith.constant 0 : i32
    %c0_i32_1 = arith.constant 0 : i32
    return %c0_i32, %c0_i32_0 : i32, i32
  }
  func.func @transform_13(%arg0: i32) -> (i32, i32) {
    %c0_i32 = arith.constant 0 : i32
    %c0_i32_0 = arith.constant 0 : i32
    %c0_i32_1 = arith.constant 0 : i32
    return %c0_i32, %c0_i32_0 : i32, i32
  }
  func.func @transform_14(%arg0: i32) -> (i32, i32) {
    %c0_i32 = arith.constant 0 : i32
    %c0_i32_0 = arith.constant 0 : i32
    %c0_i32_1 = arith.constant 0 : i32
    return %c0_i32, %c0_i32_0 : i32, i32
  }
  func.func @transform_15(%arg0: i32) -> (i32, i32) {
    %c0_i32 = arith.constant 0 : i32
    %c0_i32_0 = arith.constant 0 : i32
    %c0_i32_1 = arith.constant 0 : i32
    return %c0_i32, %c0_i32_0 : i32, i32
  }
  func.func @transform_16(%arg0: i32) -> (i32, i32, i32) {
    %c0_i32 = arith.constant 0 : i32
    %c0_i32_0 = arith.constant 0 : i32
    %c0_i32_1 = arith.constant 0 : i32
    return %arg0, %c0_i32, %c0_i32_0 : i32, i32, i32
  }
  func.func @transform_17(%arg0: i32) -> (i32, i32, i32) {
    %c0_i32 = arith.constant 0 : i32
    %c0_i32_0 = arith.constant 0 : i32
    %c0_i32_1 = arith.constant 0 : i32
    return %arg0, %c0_i32, %c0_i32_0 : i32, i32, i32
  }
  func.func @transform_18(%arg0: i32) -> (i32, i32, i32) {
    %c0_i32 = arith.constant 0 : i32
    %c0_i32_0 = arith.constant 0 : i32
    %c0_i32_1 = arith.constant 0 : i32
    return %arg0, %c0_i32, %c0_i32_0 : i32, i32, i32
  }
  func.func @transform_19(%arg0: i32) -> (i32, i32, i32) {
    %c0_i32 = arith.constant 0 : i32
    %c0_i32_0 = arith.constant 0 : i32
    %c0_i32_1 = arith.constant 0 : i32
    return %arg0, %c0_i32, %c0_i32_0 : i32, i32, i32
  }
  func.func @transform_20(%arg0: i32) -> (i32, i32, i32) {
    %c0_i32 = arith.constant 0 : i32
    %c0_i32_0 = arith.constant 0 : i32
    %c0_i32_1 = arith.constant 0 : i32
    return %arg0, %c0_i32, %c0_i32_0 : i32, i32, i32
  }
  func.func @transform_21(%arg0: i32) -> (i32, i32, i32) {
    %c0_i32 = arith.constant 0 : i32
    %c0_i32_0 = arith.constant 0 : i32
    %c0_i32_1 = arith.constant 0 : i32
    return %arg0, %c0_i32, %c0_i32_0 : i32, i32, i32
  }
  func.func @transform_22(%arg0: i32) -> (i32, i32, i32) {
    %c0_i32 = arith.constant 0 : i32
    %c0_i32_0 = arith.constant 0 : i32
    %c0_i32_1 = arith.constant 0 : i32
    return %arg0, %c0_i32, %c0_i32_0 : i32, i32, i32
  }
  func.func @transform_23(%arg0: i32) -> (i32, i32, i32) {
    %c0_i32 = arith.constant 0 : i32
    %c0_i32_0 = arith.constant 0 : i32
    %c0_i32_1 = arith.constant 0 : i32
    return %arg0, %c0_i32, %c0_i32_0 : i32, i32, i32
  }
  func.func @transform_24(%arg0: i32) -> (i32, i32, i32) {
    %c0_i32 = arith.constant 0 : i32
    %c0_i32_0 = arith.constant 0 : i32
    %c0_i32_1 = arith.constant 0 : i32
    return %arg0, %c0_i32, %c0_i32_0 : i32, i32, i32
  }
  func.func @transform_25(%arg0: i32) -> (i32, i32, i32) {
    %c0_i32 = arith.constant 0 : i32
    %c0_i32_0 = arith.constant 0 : i32
    %c0_i32_1 = arith.constant 0 : i32
    return %arg0, %c0_i32, %c0_i32_0 : i32, i32, i32
  }
}

</mosaic_0001>

<llo_original>
// kernel: worm_vae_forward.1
$region0: #{worm_vae_forward.1}
  #allocation0 [shape = 'u32[]', space=smem, size = 0x4, offset = 0x4, fixed_abs, tag = 'smem constant byte address 0x4 - core index']
  #allocation1 [shape = 'u32[144,128]{1,0:T(1,128)}', space=vmem, size = 0x12000, scoped, tag = 'internal scratch']
  %s0 = inlined_call_operand.vmem [shape: f32[2,4,24], index: 0, kind: input, shape index: {}]
  %s1 = inlined_call_operand.vmem [shape: f32[2,16,24], index: 1, kind: input, shape index: {}]
  %s2 = inlined_call_operand.vmem [shape: f32[2,16,24], index: 2, kind: input, shape index: {}]
  %s3 = inlined_call_operand.vmem [shape: f32[2,16,16], index: 3, kind: input, shape index: {}]
  %s4 = inlined_call_operand.hbm [shape: f32[2,16,16], index: 4, kind: input, shape index: {}]
  %s5 = inlined_call_operand.vmem [shape: f32[32,4], index: 5, kind: input, shape index: {}]
  %s6 = inlined_call_operand.vmem [shape: f32[32,1], index: 6, kind: input, shape index: {}]
  %s7 = inlined_call_operand.hbm [shape: f32[16,32], index: 7, kind: input, shape index: {}]
  %s8 = inlined_call_operand.vmem [shape: f32[16,1], index: 8, kind: input, shape index: {}]
  %s9 = inlined_call_operand.vmem [shape: f32[16,1], index: 9, kind: input, shape index: {}]
  %s10 = inlined_call_operand.vmem [shape: f32[32,432], index: 10, kind: input, shape index: {}]
  %s11 = inlined_call_operand.vmem [shape: f32[32,1], index: 11, kind: input, shape index: {}]
  %s12 = inlined_call_operand.hbm [shape: f32[32,32], index: 12, kind: input, shape index: {}]
  %s13 = inlined_call_operand.vmem [shape: f32[16,7], index: 13, kind: input, shape index: {}]
  %s14 = inlined_call_operand.vmem [shape: f32[16,16], index: 14, kind: input, shape index: {}]
  %s15 = inlined_call_operand.vmem [shape: f32[1,16], index: 15, kind: input, shape index: {}]
  %s16 = inlined_call_operand.hbm [shape: f32[2,16,16], index: 16, kind: output, shape index: {0}]
  %s17 = inlined_call_operand.hbm [shape: f32[2,16,16], index: 17, kind: output, shape index: {1}]
  %s18 = inlined_call_operand.hbm [shape: f32[2,16,16], index: 18, kind: output, shape index: {2}]
  %s19 = inlined_call_operand.hbm [shape: f32[2,16,16], index: 19, kind: output, shape index: {3}]
  %s20 = inlined_call_operand.hbm [shape: f32[2,16,16], index: 20, kind: output, shape index: {4}]
  %s21 = inlined_call_operand.hbm [shape: f32[2,16,16], index: 21, kind: output, shape index: {5}]
  %s22 = inlined_call_operand.hbm [shape: f32[2,16,16], index: 22, kind: output, shape index: {6}]
  %s23 = inlined_call_operand.hbm [shape: f32[2,16,16], index: 23, kind: output, shape index: {7}]
  %s24 = inlined_call_operand.hbm [shape: f32[2,16,16], index: 24, kind: output, shape index: {8}]
  %s25 = inlined_call_operand.hbm [shape: f32[2,16,16], index: 25, kind: output, shape index: {9}]
  %26 = xla_tuple %s16, %s17, %s18, %s19, %s20, %s21, %s22, %s23, %s24, %s25
  %s27 = sld [smem:[#allocation0]]
  $region181: #{worm_vae_forward.1} parent=0
    _
  %s29 = ssub.s32 1, %s27
  %s30 = scalar_select 0, %s29, %s27
  $region1: #{worm_vae_forward.1} parent=0
    #allocation2 [shape = 'u8[16384]{0}', space=vmem, size = 0x4000, scoped, tag = 'input window, operand 4']
    #allocation3 [shape = 's32[2]{0}', space=sflag, size = 0x8, scoped, tag = 'scoped memory for worm_vae_forward.1']
    #allocation4 [shape = 's32[2]{0}', space=sflag, size = 0x8, scoped, tag = 'scoped memory for worm_vae_forward.1']
    #allocation5 [shape = 'u8[8192]{0}', space=vmem, size = 0x2000, scoped, tag = 'input window, operand 7, single buffered']
    #allocation6 [shape = 's32[1]{0}', space=sflag, size = 0x4, scoped, tag = 'scoped memory for worm_vae_forward.1']
    #allocation7 [shape = 'u8[16384]{0}', space=vmem, size = 0x4000, scoped, tag = 'input window, operand 12, single buffered']
    #allocation8 [shape = 'u8[16384]{0}', space=vmem, size = 0x4000, scoped, tag = 'output window, operand 0']
    #allocation9 [shape = 'u8[16384]{0}', space=vmem, size = 0x4000, scoped, tag = 'output window, operand 1']
    #allocation10 [shape = 's32[2]{0}', space=sflag, size = 0x8, scoped, tag = 'scoped memory for worm_vae_forward.1']
    #allocation11 [shape = 'u8[16384]{0}', space=vmem, size = 0x4000, scoped, tag = 'output window, operand 2']
    #allocation12 [shape = 'u8[16384]{0}', space=vmem, size = 0x4000, scoped, tag = 'output window, operand 3']
    #allocation13 [shape = 's32[2]{0}', space=sflag, size = 0x8, scoped, tag = 'scoped memory for worm_vae_forward.1']
    #allocation14 [shape = 'u8[16384]{0}', space=vmem, size = 0x4000, scoped, tag = 'output window, operand 4']
    #allocation15 [shape = 'u8[16384]{0}', space=vmem, size = 0x4000, scoped, tag = 'output window, operand 5']
    #allocation16 [shape = 's32[2]{0}', space=sflag, size = 0x8, scoped, tag = 'scoped memory for worm_vae_forward.1']
    #allocation17 [shape = 'u8[16384]{0}', space=vmem, size = 0x4000, scoped, tag = 'output window, operand 6']
    #allocation18 [shape = 'u8[16384]{0}', space=vmem, size = 0x4000, scoped, tag = 'output window, operand 7']
    #allocation19 [shape = 's32[2]{0}', space=sflag, size = 0x8, scoped, tag = 'scoped memory for worm_vae_forward.1']
    #allocation20 [shape = 'u8[16384]{0}', space=vmem, size = 0x4000, scoped, tag = 'output window, operand 8']
    #allocation21 [shape = 'u8[16384]{0}', space=vmem, size = 0x4000, scoped, tag = 'output window, operand 9']
    #allocation22 [shape = 's32[2]{0}', space=sflag, size = 0x8, scoped, tag = 'scoped memory for worm_vae_forward.1']
    %31 = vsyncpa [#allocation3], 0
    %s32 = scalar_lea.sflag [#allocation3], 1
    %33 = vsyncpa %s32, 0
    %34 = vsyncpa [#allocation6], 0
    %35 = vsyncpa [#allocation4], 0
    %s36 = scalar_lea.sflag [#allocation4], 1
    %37 = vsyncpa %s36, 0
    %38 = vsyncpa [#allocation10], 0
    %s39 = scalar_lea.sflag [#allocation10], 1
    %40 = vsyncpa %s39, 0
    %41 = vsyncpa [#allocation13], 0
    %s42 = scalar_lea.sflag [#allocation13], 1
    %43 = vsyncpa %s42, 0
    %44 = vsyncpa [#allocation16], 0
    %s45 = scalar_lea.sflag [#allocation16], 1
    %46 = vsyncpa %s45, 0
    %47 = vsyncpa [#allocation19], 0
    %s48 = scalar_lea.sflag [#allocation19], 1
    %49 = vsyncpa %s48, 0
    %50 = vsyncpa [#allocation22], 0
    %s51 = scalar_lea.sflag [#allocation22], 1
    %52 = vsyncpa %s51, 0
    loop: start=0, step=1, limit=4
    $region2: #{worm_vae_forward.1} parent=1 // loop_pre_header
      _
    $region3: #{worm_vae_forward.1} parent=1 // loop_header
      %s54 = sphi 0, %s58
      %p55 = scmp.ge.s32.totalorder %s54, 4
      %s64 = sphi 0, %s66
      %s67 = sphi 0, %s64
      %s68 = sphi 0, %s67
      %s84 = sphi 0, %s68
      %s90 = sphi 0, %s92
      %s93 = sphi 0, %s90
      %s94 = sphi 0, %s93
      %s110 = sphi 0, %s94
      %s116 = sphi 0, %s118
      %s119 = sphi 0, %s116
      %s120 = sphi 0, %s119
      %s136 = sphi 0, %s120
      %s142 = sphi 0, %s144
      %s145 = sphi 0, %s142
      %s146 = sphi 0, %s145
      %s162 = sphi 0, %s146
      %s168 = sphi 0, %s170
      %s171 = sphi 0, %s168
      %s172 = sphi 0, %s171
      %s188 = sphi 0, %s172
      %s192 = sphi 0, %s192
      %s194 = sphi 0, %s192
      %s195 = sphi 0, %s194
      %s209 = sphi 0, %s195
      %s213 = sphi 0, %s213
      %s215 = sphi 0, %s213
      %s216 = sphi 0, %s215
      %s230 = sphi 0, %s216
      %s234 = sphi 0, %s234
      %s236 = sphi 0, %s234
      %s237 = sphi 0, %s236
      %s251 = sphi 0, %s237
      %s255 = sphi 0, %s255
      %s257 = sphi 0, %s255
      %s258 = sphi 0, %s257
      %s272 = sphi 0, %s258
      %s276 = sphi 0, %s276
      %s278 = sphi 0, %s276
      %s279 = sphi 0, %s278
      %s293 = sphi 0, %s279
      %s297 = sphi 0, %s297
      %s299 = sphi 0, %s297
      %s300 = sphi 0, %s299
      %s314 = sphi 0, %s300
      %s318 = sphi 0, %s318
      %s320 = sphi 0, %s318
      %s321 = sphi 0, %s320
      %s335 = sphi 0, %s321
      %s339 = sphi 0, %s339
      %s341 = sphi 0, %s339
      %s342 = sphi 0, %s341
      %s356 = sphi 0, %s342
      %s360 = sphi 0, %s360
      %s362 = sphi 0, %s360
      %s363 = sphi 0, %s362
      %s377 = sphi 0, %s363
      %s381 = sphi 0, %s381
      %s383 = sphi 0, %s381
      %s384 = sphi 0, %s383
      %s398 = sphi 0, %s384
      %s402 = sphi 0, %s402
      %s404 = sphi 0, %s402
      %s405 = sphi 0, %s404
      %s419 = sphi 0, %s405
      %s425 = sphi 0, %s427
      %s428 = sphi 0, %s425
      %s429 = sphi 0, %s428
      %s445 = sphi 0, %s429
      %s451 = sphi 0, %s453
      %s454 = sphi 0, %s451
      %s455 = sphi 0, %s454
      %s471 = sphi 0, %s455
      %s477 = sphi 0, %s479
      %s480 = sphi 0, %s477
      %s481 = sphi 0, %s480
      %s497 = sphi 0, %s481
      %s503 = sphi 0, %s505
      %s506 = sphi 0, %s503
      %s507 = sphi 0, %s506
      %s523 = sphi 0, %s507
      %s529 = sphi 0, %s531
      %s532 = sphi 0, %s529
      %s533 = sphi 0, %s532
      %s549 = sphi 0, %s533
      %s555 = sphi 0, %s557
      %s558 = sphi 0, %s555
      %s559 = sphi 0, %s558
      %s575 = sphi 0, %s559
      %s581 = sphi 0, %s583
      %s584 = sphi 0, %s581
      %s585 = sphi 0, %s584
      %s601 = sphi 0, %s585
      %s607 = sphi 0, %s609
      %s610 = sphi 0, %s607
      %s611 = sphi 0, %s610
      %s627 = sphi 0, %s611
      %s633 = sphi 0, %s635
      %s636 = sphi 0, %s633
      %s637 = sphi 0, %s636
      %s653 = sphi 0, %s637
      %s659 = sphi 0, %s661
      %s662 = sphi 0, %s659
      %s663 = sphi 0, %s662
      %s679 = sphi 0, %s663
    $region4: #{worm_vae_forward.1} parent=1 // loop_header_branch
      %57 = sbr.rel (%p55) target = $region8
    $region5: #{worm_vae_forward.1} parent=1 // loop_body
      %s59 = ssub.s32 %s54, 1
      %s60 = ssub.s32 %s54, 2
      %s61 = sadd.s32 %s54, 1
      %s62 = ssub.s32 %s54, %s61
      %p63 = scmp.eq.s32.totalorder %s62, 0
      %s65 = sadd.s32 %s64, 1
      %s66 = scalar_select %p63, %s64, %s65
      %p69 = pneg %p63
      %p70 = scmp.eq.s32.totalorder %s54, 1
      %p71 = por %p69, %p70
      %p72 = scmp.ne.s32.totalorder %s64, %s67
      %p73 = scmp.eq.s32.totalorder %s54, 0
      %p74 = por %p72, %p73
      %p75 = scmp.ne.s32.totalorder %s64, %s67
      %p76 = scmp.eq.s32.totalorder %s59, 1
      %p77 = por %p75, %p76
      %p78 = scmp.ne.s32.totalorder %s67, %s68
      %p79 = scmp.eq.s32.totalorder %s59, 0
      %p80 = por %p78, %p79
      %p81 = scmp.ne.s32.totalorder %s67, %s68
      %p82 = scmp.eq.s32.totalorder %s60, 1
      %p83 = por %p81, %p82
      %p85 = scmp.ne.s32.totalorder %s68, %s84
      %p86 = scmp.eq.s32.totalorder %s60, 0
      %p87 = por %p85, %p86
      %s88 = ssub.s32 %s54, %s61
      %p89 = scmp.eq.s32.totalorder %s88, 0
      %s91 = sadd.s32 %s90, 1
      %s92 = scalar_select %p89, %s90, %s91
      %p95 = pneg %p89
      %p96 = scmp.eq.s32.totalorder %s54, 1
      %p97 = por %p95, %p96
      %p98 = scmp.ne.s32.totalorder %s90, %s93
      %p99 = scmp.eq.s32.totalorder %s54, 0
      %p100 = por %p98, %p99
      %p101 = scmp.ne.s32.totalorder %s90, %s93
      %p102 = scmp.eq.s32.totalorder %s59, 1
      %p103 = por %p101, %p102
      %p104 = scmp.ne.s32.totalorder %s93, %s94
      %p105 = scmp.eq.s32.totalorder %s59, 0
      %p106 = por %p104, %p105
      %p107 = scmp.ne.s32.totalorder %s93, %s94
      %p108 = scmp.eq.s32.totalorder %s60, 1
      %p109 = por %p107, %p108
      %p111 = scmp.ne.s32.totalorder %s94, %s110
      %p112 = scmp.eq.s32.totalorder %s60, 0
      %p113 = por %p111, %p112
      %s114 = ssub.s32 %s54, %s61
      %p115 = scmp.eq.s32.totalorder %s114, 0
      %s117 = sadd.s32 %s116, 1
      %s118 = scalar_select %p115, %s116, %s117
      %p121 = pneg %p115
      %p122 = scmp.eq.s32.totalorder %s54, 1
      %p123 = por %p121, %p122
      %p124 = scmp.ne.s32.totalorder %s116, %s119
      %p125 = scmp.eq.s32.totalorder %s54, 0
      %p126 = por %p124, %p125
      %p127 = scmp.ne.s32.totalorder %s116, %s119
      %p128 = scmp.eq.s32.totalorder %s59, 1
      %p129 = por %p127, %p128
      %p130 = scmp.ne.s32.totalorder %s119, %s120
      %p131 = scmp.eq.s32.totalorder %s59, 0
      %p132 = por %p130, %p131
      %p133 = scmp.ne.s32.totalorder %s119, %s120
      %p134 = scmp.eq.s32.totalorder %s60, 1
      %p135 = por %p133, %p134
      %p137 = scmp.ne.s32.totalorder %s120, %s136
      %p138 = scmp.eq.s32.totalorder %s60, 0
      %p139 = por %p137, %p138
      %s140 = ssub.s32 %s54, %s61
      %p141 = scmp.eq.s32.totalorder %s140, 0
      %s143 = sadd.s32 %s142, 1
      %s144 = scalar_select %p141, %s142, %s143
      %p147 = pneg %p141
      %p148 = scmp.eq.s32.totalorder %s54, 1
      %p149 = por %p147, %p148
      %p150 = scmp.ne.s32.totalorder %s142, %s145
      %p151 = scmp.eq.s32.totalorder %s54, 0
      %p152 = por %p150, %p151
      %p153 = scmp.ne.s32.totalorder %s142, %s145
      %p154 = scmp.eq.s32.totalorder %s59, 1
      %p155 = por %p153, %p154
      %p156 = scmp.ne.s32.totalorder %s145, %s146
      %p157 = scmp.eq.s32.totalorder %s59, 0
      %p158 = por %p156, %p157
      %p159 = scmp.ne.s32.totalorder %s145, %s146
      %p160 = scmp.eq.s32.totalorder %s60, 1
      %p161 = por %p159, %p160
      %p163 = scmp.ne.s32.totalorder %s146, %s162
      %p164 = scmp.eq.s32.totalorder %s60, 0
      %p165 = por %p163, %p164
      %s166 = ssub.s32 %s54, %s61
      %p167 = scmp.eq.s32.totalorder %s166, 0
      %s169 = sadd.s32 %s168, 1
      %s170 = scalar_select %p167, %s168, %s169
      %p173 = pneg %p167
      %p174 = scmp.eq.s32.totalorder %s54, 1
      %p175 = por %p173, %p174
      %p176 = scmp.ne.s32.totalorder %s168, %s171
      %p177 = scmp.eq.s32.totalorder %s54, 0
      %p178 = por %p176, %p177
      %p179 = scmp.ne.s32.totalorder %s168, %s171
      %p180 = scmp.eq.s32.totalorder %s59, 1
      %p181 = por %p179, %p180
      %p182 = scmp.ne.s32.totalorder %s171, %s172
      %p183 = scmp.eq.s32.totalorder %s59, 0
      %p184 = por %p182, %p183
      %p185 = scmp.ne.s32.totalorder %s171, %s172
      %p186 = scmp.eq.s32.totalorder %s60, 1
      %p187 = por %p185, %p186
      %p189 = scmp.ne.s32.totalorder %s172, %s188
      %p190 = scmp.eq.s32.totalorder %s60, 0
      %p191 = por %p189, %p190
      %s193 = sadd.s32 %s192, 1
      %p196 = scmp.eq.s32.totalorder %s54, 1
      %p197 = scmp.ne.s32.totalorder %s192, %s194
      %p198 = scmp.eq.s32.totalorder %s54, 0
      %p199 = por %p197, %p198
      %p200 = scmp.ne.s32.totalorder %s192, %s194
      %p201 = scmp.eq.s32.totalorder %s59, 1
      %p202 = por %p200, %p201
      %p203 = scmp.ne.s32.totalorder %s194, %s195
      %p204 = scmp.eq.s32.totalorder %s59, 0
      %p205 = por %p203, %p204
      %p206 = scmp.ne.s32.totalorder %s194, %s195
      %p207 = scmp.eq.s32.totalorder %s60, 1
      %p208 = por %p206, %p207
      %p210 = scmp.ne.s32.totalorder %s195, %s209
      %p211 = scmp.eq.s32.totalorder %s60, 0
      %p212 = por %p210, %p211
      %s214 = sadd.s32 %s213, 1
      %p217 = scmp.eq.s32.totalorder %s54, 1
      %p218 = scmp.ne.s32.totalorder %s213, %s215
      %p219 = scmp.eq.s32.totalorder %s54, 0
      %p220 = por %p218, %p219
      %p221 = scmp.ne.s32.totalorder %s213, %s215
      %p222 = scmp.eq.s32.totalorder %s59, 1
      %p223 = por %p221, %p222
      %p224 = scmp.ne.s32.totalorder %s215, %s216
      %p225 = scmp.eq.s32.totalorder %s59, 0
      %p226 = por %p224, %p225
      %p227 = scmp.ne.s32.totalorder %s215, %s216
      %p228 = scmp.eq.s32.totalorder %s60, 1
      %p229 = por %p227, %p228
      %p231 = scmp.ne.s32.totalorder %s216, %s230
      %p232 = scmp.eq.s32.totalorder %s60, 0
      %p233 = por %p231, %p232
      %s235 = sadd.s32 %s234, 1
      %p238 = scmp.eq.s32.totalorder %s54, 1
      %p239 = scmp.ne.s32.totalorder %s234, %s236
      %p240 = scmp.eq.s32.totalorder %s54, 0
      %p241 = por %p239, %p240
      %p242 = scmp.ne.s32.totalorder %s234, %s236
      %p243 = scmp.eq.s32.totalorder %s59, 1
      %p244 = por %p242, %p243
      %p245 = scmp.ne.s32.totalorder %s236, %s237
      %p246 = scmp.eq.s32.totalorder %s59, 0
      %p247 = por %p245, %p246
      %p248 = scmp.ne.s32.totalorder %s236, %s237
      %p249 = scmp.eq.s32.totalorder %s60, 1
      %p250 = por %p248, %p249
      %p252 = scmp.ne.s32.totalorder %s237, %s251
      %p253 = scmp.eq.s32.totalorder %s60, 0
      %p254 = por %p252, %p253
      %s256 = sadd.s32 %s255, 1
      %p259 = scmp.eq.s32.totalorder %s54, 1
      %p260 = scmp.ne.s32.totalorder %s255, %s257
      %p261 = scmp.eq.s32.totalorder %s54, 0
      %p262 = por %p260, %p261
      %p263 = scmp.ne.s32.totalorder %s255, %s257
      %p264 = scmp.eq.s32.totalorder %s59, 1
      %p265 = por %p263, %p264
      %p266 = scmp.ne.s32.totalorder %s257, %s258
      %p267 = scmp.eq.s32.totalorder %s59, 0
      %p268 = por %p266, %p267
      %p269 = scmp.ne.s32.totalorder %s257, %s258
      %p270 = scmp.eq.s32.totalorder %s60, 1
      %p271 = por %p269, %p270
      %p273 = scmp.ne.s32.totalorder %s258, %s272
      %p274 = scmp.eq.s32.totalorder %s60, 0
      %p275 = por %p273, %p274
      %s277 = sadd.s32 %s276, 1
      %p280 = scmp.eq.s32.totalorder %s54, 1
      %p281 = scmp.ne.s32.totalorder %s276, %s278
      %p282 = scmp.eq.s32.totalorder %s54, 0
      %p283 = por %p281, %p282
      %p284 = scmp.ne.s32.totalorder %s276, %s278
      %p285 = scmp.eq.s32.totalorder %s59, 1
      %p286 = por %p284, %p285
      %p287 = scmp.ne.s32.totalorder %s278, %s279
      %p288 = scmp.eq.s32.totalorder %s59, 0
      %p289 = por %p287, %p288
      %p290 = scmp.ne.s32.totalorder %s278, %s279
      %p291 = scmp.eq.s32.totalorder %s60, 1
      %p292 = por %p290, %p291
      %p294 = scmp.ne.s32.totalorder %s279, %s293
      %p295 = scmp.eq.s32.totalorder %s60, 0
      %p296 = por %p294, %p295
      %s298 = sadd.s32 %s297, 1
      %p301 = scmp.eq.s32.totalorder %s54, 1
      %p302 = scmp.ne.s32.totalorder %s297, %s299
      %p303 = scmp.eq.s32.totalorder %s54, 0
      %p304 = por %p302, %p303
      %p305 = scmp.ne.s32.totalorder %s297, %s299
      %p306 = scmp.eq.s32.totalorder %s59, 1
      %p307 = por %p305, %p306
      %p308 = scmp.ne.s32.totalorder %s299, %s300
      %p309 = scmp.eq.s32.totalorder %s59, 0
      %p310 = por %p308, %p309
      %p311 = scmp.ne.s32.totalorder %s299, %s300
      %p312 = scmp.eq.s32.totalorder %s60, 1
      %p313 = por %p311, %p312
      %p315 = scmp.ne.s32.totalorder %s300, %s314
      %p316 = scmp.eq.s32.totalorder %s60, 0
      %p317 = por %p315, %p316
      %s319 = sadd.s32 %s318, 1
      %p322 = scmp.eq.s32.totalorder %s54, 1
      %p323 = scmp.ne.s32.totalorder %s318, %s320
      %p324 = scmp.eq.s32.totalorder %s54, 0
      %p325 = por %p323, %p324
      %p326 = scmp.ne.s32.totalorder %s318, %s320
      %p327 = scmp.eq.s32.totalorder %s59, 1
      %p328 = por %p326, %p327
      %p329 = scmp.ne.s32.totalorder %s320, %s321
      %p330 = scmp.eq.s32.totalorder %s59, 0
      %p331 = por %p329, %p330
      %p332 = scmp.ne.s32.totalorder %s320, %s321
      %p333 = scmp.eq.s32.totalorder %s60, 1
      %p334 = por %p332, %p333
      %p336 = scmp.ne.s32.totalorder %s321, %s335
      %p337 = scmp.eq.s32.totalorder %s60, 0
      %p338 = por %p336, %p337
      %s340 = sadd.s32 %s339, 1
      %p343 = scmp.eq.s32.totalorder %s54, 1
      %p344 = scmp.ne.s32.totalorder %s339, %s341
      %p345 = scmp.eq.s32.totalorder %s54, 0
      %p346 = por %p344, %p345
      %p347 = scmp.ne.s32.totalorder %s339, %s341
      %p348 = scmp.eq.s32.totalorder %s59, 1
      %p349 = por %p347, %p348
      %p350 = scmp.ne.s32.totalorder %s341, %s342
      %p351 = scmp.eq.s32.totalorder %s59, 0
      %p352 = por %p350, %p351
      %p353 = scmp.ne.s32.totalorder %s341, %s342
      %p354 = scmp.eq.s32.totalorder %s60, 1
      %p355 = por %p353, %p354
      %p357 = scmp.ne.s32.totalorder %s342, %s356
      %p358 = scmp.eq.s32.totalorder %s60, 0
      %p359 = por %p357, %p358
      %s361 = sadd.s32 %s360, 1
      %p364 = scmp.eq.s32.totalorder %s54, 1
      %p365 = scmp.ne.s32.totalorder %s360, %s362
      %p366 = scmp.eq.s32.totalorder %s54, 0
      %p367 = por %p365, %p366
      %p368 = scmp.ne.s32.totalorder %s360, %s362
      %p369 = scmp.eq.s32.totalorder %s59, 1
      %p370 = por %p368, %p369
      %p371 = scmp.ne.s32.totalorder %s362, %s363
      %p372 = scmp.eq.s32.totalorder %s59, 0
      %p373 = por %p371, %p372
      %p374 = scmp.ne.s32.totalorder %s362, %s363
      %p375 = scmp.eq.s32.totalorder %s60, 1
      %p376 = por %p374, %p375
      %p378 = scmp.ne.s32.totalorder %s363, %s377
      %p379 = scmp.eq.s32.totalorder %s60, 0
      %p380 = por %p378, %p379
      %s382 = sadd.s32 %s381, 1
      %p385 = scmp.eq.s32.totalorder %s54, 1
      %p386 = scmp.ne.s32.totalorder %s381, %s383
      %p387 = scmp.eq.s32.totalorder %s54, 0
      %p388 = por %p386, %p387
      %p389 = scmp.ne.s32.totalorder %s381, %s383
      %p390 = scmp.eq.s32.totalorder %s59, 1
      %p391 = por %p389, %p390
      %p392 = scmp.ne.s32.totalorder %s383, %s384
      %p393 = scmp.eq.s32.totalorder %s59, 0
      %p394 = por %p392, %p393
      %p395 = scmp.ne.s32.totalorder %s383, %s384
      %p396 = scmp.eq.s32.totalorder %s60, 1
      %p397 = por %p395, %p396
      %p399 = scmp.ne.s32.totalorder %s384, %s398
      %p400 = scmp.eq.s32.totalorder %s60, 0
      %p401 = por %p399, %p400
      %s403 = sadd.s32 %s402, 1
      %p406 = scmp.eq.s32.totalorder %s54, 1
      %p407 = scmp.ne.s32.totalorder %s402, %s404
      %p408 = scmp.eq.s32.totalorder %s54, 0
      %p409 = por %p407, %p408
      %p410 = scmp.ne.s32.totalorder %s402, %s404
      %p411 = scmp.eq.s32.totalorder %s59, 1
      %p412 = por %p410, %p411
      %p413 = scmp.ne.s32.totalorder %s404, %s405
      %p414 = scmp.eq.s32.totalorder %s59, 0
      %p415 = por %p413, %p414
      %p416 = scmp.ne.s32.totalorder %s404, %s405
      %p417 = scmp.eq.s32.totalorder %s60, 1
      %p418 = por %p416, %p417
      %p420 = scmp.ne.s32.totalorder %s405, %s419
      %p421 = scmp.eq.s32.totalorder %s60, 0
      %p422 = por %p420, %p421
      %s423 = ssub.s32 %s54, %s61
      %p424 = scmp.eq.s32.totalorder %s423, 0
      %s426 = sadd.s32 %s425, 1
      %s427 = scalar_select %p424, %s425, %s426
      %p430 = pneg %p424
      %p431 = scmp.eq.s32.totalorder %s54, 1
      %p432 = por %p430, %p431
      %p433 = scmp.ne.s32.totalorder %s425, %s428
      %p434 = scmp.eq.s32.totalorder %s54, 0
      %p435 = por %p433, %p434
      %p436 = scmp.ne.s32.totalorder %s425, %s428
      %p437 = scmp.eq.s32.totalorder %s59, 1
      %p438 = por %p436, %p437
      %p439 = scmp.ne.s32.totalorder %s428, %s429
      %p440 = scmp.eq.s32.totalorder %s59, 0
      %p441 = por %p439, %p440
      %p442 = scmp.ne.s32.totalorder %s428, %s429
      %p443 = scmp.eq.s32.totalorder %s60, 1
      %p444 = por %p442, %p443
      %p446 = scmp.ne.s32.totalorder %s429, %s445
      %p447 = scmp.eq.s32.totalorder %s60, 0
      %p448 = por %p446, %p447
      %s449 = ssub.s32 %s54, %s61
      %p450 = scmp.eq.s32.totalorder %s449, 0
      %s452 = sadd.s32 %s451, 1
      %s453 = scalar_select %p450, %s451, %s452
      %p456 = pneg %p450
      %p457 = scmp.eq.s32.totalorder %s54, 1
      %p458 = por %p456, %p457
      %p459 = scmp.ne.s32.totalorder %s451, %s454
      %p460 = scmp.eq.s32.totalorder %s54, 0
      %p461 = por %p459, %p460
      %p462 = scmp.ne.s32.totalorder %s451, %s454
      %p463 = scmp.eq.s32.totalorder %s59, 1
      %p464 = por %p462, %p463
      %p465 = scmp.ne.s32.totalorder %s454, %s455
      %p466 = scmp.eq.s32.totalorder %s59, 0
      %p467 = por %p465, %p466
      %p468 = scmp.ne.s32.totalorder %s454, %s455
      %p469 = scmp.eq.s32.totalorder %s60, 1
      %p470 = por %p468, %p469
      %p472 = scmp.ne.s32.totalorder %s455, %s471
      %p473 = scmp.eq.s32.totalorder %s60, 0
      %p474 = por %p472, %p473
      %s475 = ssub.s32 %s54, %s61
      %p476 = scmp.eq.s32.totalorder %s475, 0
      %s478 = sadd.s32 %s477, 1
      %s479 = scalar_select %p476, %s477, %s478
      %p482 = pneg %p476
      %p483 = scmp.eq.s32.totalorder %s54, 1
      %p484 = por %p482, %p483
      %p485 = scmp.ne.s32.totalorder %s477, %s480
      %p486 = scmp.eq.s32.totalorder %s54, 0
      %p487 = por %p485, %p486
      %p488 = scmp.ne.s32.totalorder %s477, %s480
      %p489 = scmp.eq.s32.totalorder %s59, 1
      %p490 = por %p488, %p489
      %p491 = scmp.ne.s32.totalorder %s480, %s481
      %p492 = scmp.eq.s32.totalorder %s59, 0
      %p493 = por %p491, %p492
      %p494 = scmp.ne.s32.totalorder %s480, %s481
      %p495 = scmp.eq.s32.totalorder %s60, 1
      %p496 = por %p494, %p495
      %p498 = scmp.ne.s32.totalorder %s481, %s497
      %p499 = scmp.eq.s32.totalorder %s60, 0
      %p500 = por %p498, %p499
      %s501 = ssub.s32 %s54, %s61
      %p502 = scmp.eq.s32.totalorder %s501, 0
      %s504 = sadd.s32 %s503, 1
      %s505 = scalar_select %p502, %s503, %s504
      %p508 = pneg %p502
      %p509 = scmp.eq.s32.totalorder %s54, 1
      %p510 = por %p508, %p509
      %p511 = scmp.ne.s32.totalorder %s503, %s506
      %p512 = scmp.eq.s32.totalorder %s54, 0
      %p513 = por %p511, %p512
      %p514 = scmp.ne.s32.totalorder %s503, %s506
      %p515 = scmp.eq.s32.totalorder %s59, 1
      %p516 = por %p514, %p515
      %p517 = scmp.ne.s32.totalorder %s506, %s507
      %p518 = scmp.eq.s32.totalorder %s59, 0
      %p519 = por %p517, %p518
      %p520 = scmp.ne.s32.totalorder %s506, %s507
      %p521 = scmp.eq.s32.totalorder %s60, 1
      %p522 = por %p520, %p521
      %p524 = scmp.ne.s32.totalorder %s507, %s523
      %p525 = scmp.eq.s32.totalorder %s60, 0
      %p526 = por %p524, %p525
      %s527 = ssub.s32 %s54, %s61
      %p528 = scmp.eq.s32.totalorder %s527, 0
      %s530 = sadd.s32 %s529, 1
      %s531 = scalar_select %p528, %s529, %s530
      %p534 = pneg %p528
      %p535 = scmp.eq.s32.totalorder %s54, 1
      %p536 = por %p534, %p535
      %p537 = scmp.ne.s32.totalorder %s529, %s532
      %p538 = scmp.eq.s32.totalorder %s54, 0
      %p539 = por %p537, %p538
      %p540 = scmp.ne.s32.totalorder %s529, %s532
      %p541 = scmp.eq.s32.totalorder %s59, 1
      %p542 = por %p540, %p541
      %p543 = scmp.ne.s32.totalorder %s532, %s533
      %p544 = scmp.eq.s32.totalorder %s59, 0
      %p545 = por %p543, %p544
      %p546 = scmp.ne.s32.totalorder %s532, %s533
      %p547 = scmp.eq.s32.totalorder %s60, 1
      %p548 = por %p546, %p547
      %p550 = scmp.ne.s32.totalorder %s533, %s549
      %p551 = scmp.eq.s32.totalorder %s60, 0
      %p552 = por %p550, %p551
      %s553 = ssub.s32 %s54, %s61
      %p554 = scmp.eq.s32.totalorder %s553, 0
      %s556 = sadd.s32 %s555, 1
      %s557 = scalar_select %p554, %s555, %s556
      %p560 = pneg %p554
      %p561 = scmp.eq.s32.totalorder %s54, 1
      %p562 = por %p560, %p561
      %p563 = scmp.ne.s32.totalorder %s555, %s558
      %p564 = scmp.eq.s32.totalorder %s54, 0
      %p565 = por %p563, %p564
      %p566 = scmp.ne.s32.totalorder %s555, %s558
      %p567 = scmp.eq.s32.totalorder %s59, 1
      %p568 = por %p566, %p567
      %p569 = scmp.ne.s32.totalorder %s558, %s559
      %p570 = scmp.eq.s32.totalorder %s59, 0
      %p571 = por %p569, %p570
      %p572 = scmp.ne.s32.totalorder %s558, %s559
      %p573 = scmp.eq.s32.totalorder %s60, 1
      %p574 = por %p572, %p573
      %p576 = scmp.ne.s32.totalorder %s559, %s575
      %p577 = scmp.eq.s32.totalorder %s60, 0
      %p578 = por %p576, %p577
      %s579 = ssub.s32 %s54, %s61
      %p580 = scmp.eq.s32.totalorder %s579, 0
      %s582 = sadd.s32 %s581, 1
      %s583 = scalar_select %p580, %s581, %s582
      %p586 = pneg %p580
      %p587 = scmp.eq.s32.totalorder %s54, 1
      %p588 = por %p586, %p587
      %p589 = scmp.ne.s32.totalorder %s581, %s584
      %p590 = scmp.eq.s32.totalorder %s54, 0
      %p591 = por %p589, %p590
      %p592 = scmp.ne.s32.totalorder %s581, %s584
      %p593 = scmp.eq.s32.totalorder %s59, 1
      %p594 = por %p592, %p593
      %p595 = scmp.ne.s32.totalorder %s584, %s585
      %p596 = scmp.eq.s32.totalorder %s59, 0
      %p597 = por %p595, %p596
      %p598 = scmp.ne.s32.totalorder %s584, %s585
      %p599 = scmp.eq.s32.totalorder %s60, 1
      %p600 = por %p598, %p599
      %p602 = scmp.ne.s32.totalorder %s585, %s601
      %p603 = scmp.eq.s32.totalorder %s60, 0
      %p604 = por %p602, %p603
      %s605 = ssub.s32 %s54, %s61
      %p606 = scmp.eq.s32.totalorder %s605, 0
      %s608 = sadd.s32 %s607, 1
      %s609 = scalar_select %p606, %s607, %s608
      %p612 = pneg %p606
      %p613 = scmp.eq.s32.totalorder %s54, 1
      %p614 = por %p612, %p613
      %p615 = scmp.ne.s32.totalorder %s607, %s610
      %p616 = scmp.eq.s32.totalorder %s54, 0
      %p617 = por %p615, %p616
      %p618 = scmp.ne.s32.totalorder %s607, %s610
      %p619 = scmp.eq.s32.totalorder %s59, 1
      %p620 = por %p618, %p619
      %p621 = scmp.ne.s32.totalorder %s610, %s611
      %p622 = scmp.eq.s32.totalorder %s59, 0
      %p623 = por %p621, %p622
      %p624 = scmp.ne.s32.totalorder %s610, %s611
      %p625 = scmp.eq.s32.totalorder %s60, 1
      %p626 = por %p624, %p625
      %p628 = scmp.ne.s32.totalorder %s611, %s627
      %p629 = scmp.eq.s32.totalorder %s60, 0
      %p630 = por %p628, %p629
      %s631 = ssub.s32 %s54, %s61
      %p632 = scmp.eq.s32.totalorder %s631, 0
      %s634 = sadd.s32 %s633, 1
      %s635 = scalar_select %p632, %s633, %s634
      %p638 = pneg %p632
      %p639 = scmp.eq.s32.totalorder %s54, 1
      %p640 = por %p638, %p639
      %p641 = scmp.ne.s32.totalorder %s633, %s636
      %p642 = scmp.eq.s32.totalorder %s54, 0
      %p643 = por %p641, %p642
      %p644 = scmp.ne.s32.totalorder %s633, %s636
      %p645 = scmp.eq.s32.totalorder %s59, 1
      %p646 = por %p644, %p645
      %p647 = scmp.ne.s32.totalorder %s636, %s637
      %p648 = scmp.eq.s32.totalorder %s59, 0
      %p649 = por %p647, %p648
      %p650 = scmp.ne.s32.totalorder %s636, %s637
      %p651 = scmp.eq.s32.totalorder %s60, 1
      %p652 = por %p650, %p651
      %p654 = scmp.ne.s32.totalorder %s637, %s653
      %p655 = scmp.eq.s32.totalorder %s60, 0
      %p656 = por %p654, %p655
      %s657 = ssub.s32 %s54, %s61
      %p658 = scmp.eq.s32.totalorder %s657, 0
      %s660 = sadd.s32 %s659, 1
      %s661 = scalar_select %p658, %s659, %s660
      %p664 = pneg %p658
      %p665 = scmp.eq.s32.totalorder %s54, 1
      %p666 = por %p664, %p665
      %p667 = scmp.ne.s32.totalorder %s659, %s662
      %p668 = scmp.eq.s32.totalorder %s54, 0
      %p669 = por %p667, %p668
      %p670 = scmp.ne.s32.totalorder %s659, %s662
      %p671 = scmp.eq.s32.totalorder %s59, 1
      %p672 = por %p670, %p671
      %p673 = scmp.ne.s32.totalorder %s662, %s663
      %p674 = scmp.eq.s32.totalorder %s59, 0
      %p675 = por %p673, %p674
      %p676 = scmp.ne.s32.totalorder %s662, %s663
      %p677 = scmp.eq.s32.totalorder %s60, 1
      %p678 = por %p676, %p677
      %p680 = scmp.ne.s32.totalorder %s663, %s679
      %p681 = scmp.eq.s32.totalorder %s60, 0
      %p682 = por %p680, %p681
      %p683 = scmp.le.s32.totalorder 1, %s54
      %p684 = scmp.lt.s32.totalorder %s54, 3
      %p685 = pnand %p683, %p684
      %p686 = pneg %p685
      // Predicated region
      $region9: #{worm_vae_forward.1} parent=5 // pred_check
        _
      $region10: #{worm_vae_forward.1} parent=5 // pred_check_branch
        %688 = sbr.rel (%p685) target = $region12
      $region11: #{worm_vae_forward.1} parent=5 // pred_region
        %s689 = ssub.s32 %s54, 1
        // Predicated region
        $region13: #{worm_vae_forward.1} parent=11 // pred_check
          %p690 = pneg %p205
        $region14: #{worm_vae_forward.1} parent=11 // pred_check_branch
          %692 = sbr.rel (%p690) target = $region16
        $region15: #{worm_vae_forward.1} parent=11 // pred_region
          _
        $region16: #{worm_vae_forward.1} parent=11 // pred_fallthru
          _
        // Predicated region
        $region17: #{worm_vae_forward.1} parent=11 // pred_check
          %p693 = pneg %p226
        $region18: #{worm_vae_forward.1} parent=11 // pred_check_branch
          %695 = sbr.rel (%p693) target = $region20
        $region19: #{worm_vae_forward.1} parent=11 // pred_region
          _
        $region20: #{worm_vae_forward.1} parent=11 // pred_fallthru
          _
        // Predicated region
        $region21: #{worm_vae_forward.1} parent=11 // pred_check
          %p696 = pneg %p247
        $region22: #{worm_vae_forward.1} parent=11 // pred_check_branch
          %698 = sbr.rel (%p696) target = $region24
        $region23: #{worm_vae_forward.1} parent=11 // pred_region
          %s700 = ssub.s32 256, 256
          %701 = vsyncadd [#allocation6], %s700
          %s702 = sshll.u32 [#allocation5], 4
          %s703 = int_to_ptr.vmem [resolvable:$true] %s702
          %708 = dma.hbm_to_vmem [thread:$0]  %s7, 256, %s703, [#allocation6], 128, 128, 8
        $region24: #{worm_vae_forward.1} parent=11 // pred_fallthru
          _
        // Predicated region
        $region25: #{worm_vae_forward.1} parent=11 // pred_check
          %p709 = pneg %p268
        $region26: #{worm_vae_forward.1} parent=11 // pred_check_branch
          %711 = sbr.rel (%p709) target = $region28
        $region27: #{worm_vae_forward.1} parent=11 // pred_region
          _
        $region28: #{worm_vae_forward.1} parent=11 // pred_fallthru
          _
        // Predicated region
        $region29: #{worm_vae_forward.1} parent=11 // pred_check
          %p712 = pneg %p289
        $region30: #{worm_vae_forward.1} parent=11 // pred_check_branch
          %714 = sbr.rel (%p712) target = $region32
        $region31: #{worm_vae_forward.1} parent=11 // pred_region
          _
        $region32: #{worm_vae_forward.1} parent=11 // pred_fallthru
          _
        // Predicated region
        $region33: #{worm_vae_forward.1} parent=11 // pred_check
          %p715 = pneg %p310
        $region34: #{worm_vae_forward.1} parent=11 // pred_check_branch
          %717 = sbr.rel (%p715) target = $region36
        $region35: #{worm_vae_forward.1} parent=11 // pred_region
          _
        $region36: #{worm_vae_forward.1} parent=11 // pred_fallthru
          _
        // Predicated region
        $region37: #{worm_vae_forward.1} parent=11 // pred_check
          %p718 = pneg %p331
        $region38: #{worm_vae_forward.1} parent=11 // pred_check_branch
          %720 = sbr.rel (%p718) target = $region40
        $region39: #{worm_vae_forward.1} parent=11 // pred_region
          _
        $region40: #{worm_vae_forward.1} parent=11 // pred_fallthru
          _
        // Predicated region
        $region41: #{worm_vae_forward.1} parent=11 // pred_check
          %p721 = pneg %p352
        $region42: #{worm_vae_forward.1} parent=11 // pred_check_branch
          %723 = sbr.rel (%p721) target = $region44
        $region43: #{worm_vae_forward.1} parent=11 // pred_region
          %s725 = ssub.s32 512, 512
          %726 = vsyncadd [#allocation6], %s725
          %s727 = sshll.u32 [#allocation7], 4
          %s728 = int_to_ptr.vmem [resolvable:$true] %s727
          %733 = dma.hbm_to_vmem [thread:$0]  %s12, 512, %s728, [#allocation6], 128, 128, 8
        $region44: #{worm_vae_forward.1} parent=11 // pred_fallthru
          _
        // Predicated region
        $region45: #{worm_vae_forward.1} parent=11 // pred_check
          %p734 = pneg %p373
        $region46: #{worm_vae_forward.1} parent=11 // pred_check_branch
          %736 = sbr.rel (%p734) target = $region48
        $region47: #{worm_vae_forward.1} parent=11 // pred_region
          _
        $region48: #{worm_vae_forward.1} parent=11 // pred_fallthru
          _
        // Predicated region
        $region49: #{worm_vae_forward.1} parent=11 // pred_check
          %p737 = pneg %p394
        $region50: #{worm_vae_forward.1} parent=11 // pred_check_branch
          %739 = sbr.rel (%p737) target = $region52
        $region51: #{worm_vae_forward.1} parent=11 // pred_region
          _
        $region52: #{worm_vae_forward.1} parent=11 // pred_fallthru
          _
        // Predicated region
        $region53: #{worm_vae_forward.1} parent=11 // pred_check
          %p740 = pneg %p415
        $region54: #{worm_vae_forward.1} parent=11 // pred_check_branch
          %742 = sbr.rel (%p740) target = $region56
        $region55: #{worm_vae_forward.1} parent=11 // pred_region
          _
        $region56: #{worm_vae_forward.1} parent=11 // pred_fallthru
          _
      $region12: #{worm_vae_forward.1} parent=5 // pred_fallthru
        _
      %p743 = scmp.lt.s32.totalorder %s54, 2
      // Predicated region
      $region57: #{worm_vae_forward.1} parent=5 // pred_check
        %p744 = pneg %p743
      $region58: #{worm_vae_forward.1} parent=5 // pred_check_branch
        %746 = sbr.rel (%p744) target = $region60
      $region59: #{worm_vae_forward.1} parent=5 // pred_region
        // Predicated region
        $region61: #{worm_vae_forward.1} parent=59 // pred_check
          %p747 = pneg %p74
        $region62: #{worm_vae_forward.1} parent=59 // pred_check_branch
          %749 = sbr.rel (%p747) target = $region64
        $region63: #{worm_vae_forward.1} parent=59 // pred_region
          %p750 = scmp.lt.s32.totalorder %s54, 1
          %s751 = scalar_select %p750, %s54, 1
          %s752 = smul.addr %s751, 4
          %s753 = scalar_lea.vmem %s0, %s752
        $region64: #{worm_vae_forward.1} parent=59 // pred_fallthru
          _
        // Predicated region
        $region65: #{worm_vae_forward.1} parent=59 // pred_check
          %p754 = pneg %p100
        $region66: #{worm_vae_forward.1} parent=59 // pred_check_branch
          %756 = sbr.rel (%p754) target = $region68
        $region67: #{worm_vae_forward.1} parent=59 // pred_region
          %p757 = scmp.lt.s32.totalorder %s54, 1
          %s758 = scalar_select %p757, %s54, 1
          %s759 = smul.addr %s758, 2
          %s760 = smul.addr %s759, 8
          %s761 = scalar_lea.vmem %s1, %s760
        $region68: #{worm_vae_forward.1} parent=59 // pred_fallthru
          _
        // Predicated region
        $region69: #{worm_vae_forward.1} parent=59 // pred_check
          %p762 = pneg %p126
        $region70: #{worm_vae_forward.1} parent=59 // pred_check_branch
          %764 = sbr.rel (%p762) target = $region72
        $region71: #{worm_vae_forward.1} parent=59 // pred_region
          %p765 = scmp.lt.s32.totalorder %s54, 1
          %s766 = scalar_select %p765, %s54, 1
          %s767 = smul.addr %s766, 2
          %s768 = smul.addr %s767, 8
          %s769 = scalar_lea.vmem %s2, %s768
        $region72: #{worm_vae_forward.1} parent=59 // pred_fallthru
          _
        // Predicated region
        $region73: #{worm_vae_forward.1} parent=59 // pred_check
          %p770 = pneg %p152
        $region74: #{worm_vae_forward.1} parent=59 // pred_check_branch
          %772 = sbr.rel (%p770) target = $region76
        $region75: #{worm_vae_forward.1} parent=59 // pred_region
          %p773 = scmp.lt.s32.totalorder %s54, 1
          %s774 = scalar_select %p773, %s54, 1
          %s775 = smul.addr %s774, 2
          %s776 = smul.addr %s775, 8
          %s777 = scalar_lea.vmem %s3, %s776
        $region76: #{worm_vae_forward.1} parent=59 // pred_fallthru
          _
        // Predicated region
        $region77: #{worm_vae_forward.1} parent=59 // pred_check
          %p778 = pneg %p178
        $region78: #{worm_vae_forward.1} parent=59 // pred_check_branch
          %780 = sbr.rel (%p778) target = $region80
        $region79: #{worm_vae_forward.1} parent=59 // pred_region
          %s781 = sand.u32 %s168, 1
          %s782 = scalar_lea.sflag [#allocation3], %s781
          %s783 = sand.u32 %s168, 1
          %s784 = smul.addr %s783, 16
          %s785 = scalar_lea.vmem [#allocation2], %s784
          %s787 = ssub.s32 256, 256
          %788 = vsyncadd %s782, %s787
          %s789 = smul.addr %s54, 2
          %s790 = smul.addr %s789, 128
          %s791 = scalar_lea.hbm %s4, %s790
          %s792 = sshll.u32 %s785, 4
          %s793 = int_to_ptr.vmem [resolvable:$true] %s792
          %798 = dma.hbm_to_vmem [thread:$0]  %s791, 256, %s793, %s782, 128, 128, 8
        $region80: #{worm_vae_forward.1} parent=59 // pred_fallthru
          _
      $region60: #{worm_vae_forward.1} parent=5 // pred_fallthru
        _
      %p799 = scmp.le.s32.totalorder 1, %s54
      %p800 = scmp.lt.s32.totalorder %s54, 3
      %p801 = pnand %p799, %p800
      %p802 = pneg %p801
      // Predicated region
      $region81: #{worm_vae_forward.1} parent=5 // pred_check
        _
      $region82: #{worm_vae_forward.1} parent=5 // pred_check_branch
        %804 = sbr.rel (%p801) target = $region84
      $region83: #{worm_vae_forward.1} parent=5 // pred_region
        %s805 = ssub.s32 %s54, 1
        %s806 = sand.u32 %s171, 1
        %s807 = scalar_lea.sflag [#allocation3], %s806
        %s808 = sand.u32 %s171, 1
        %s809 = smul.addr %s808, 16
        %s810 = scalar_lea.vmem [#allocation2], %s809
        // Predicated region
        $region85: #{worm_vae_forward.1} parent=83 // pred_check
          %p811 = pneg %p184
        $region86: #{worm_vae_forward.1} parent=83 // pred_check_branch
          %813 = sbr.rel (%p811) target = $region88
        $region87: #{worm_vae_forward.1} parent=83 // pred_region
          %814 = dma.done %s807, 256
        $region88: #{worm_vae_forward.1} parent=83 // pred_fallthru
          _
        // Predicated region
        $region89: #{worm_vae_forward.1} parent=83 // pred_check
          %p815 = pneg %p247
        $region90: #{worm_vae_forward.1} parent=83 // pred_check_branch
          %817 = sbr.rel (%p815) target = $region92
        $region91: #{worm_vae_forward.1} parent=83 // pred_region
          %818 = dma.done [#allocation6], 256
        $region92: #{worm_vae_forward.1} parent=83 // pred_fallthru
          _
        // Predicated region
        $region93: #{worm_vae_forward.1} parent=83 // pred_check
          %p819 = pneg %p352
        $region94: #{worm_vae_forward.1} parent=83 // pred_check_branch
          %821 = sbr.rel (%p819) target = $region96
        $region95: #{worm_vae_forward.1} parent=83 // pred_region
          %822 = dma.done [#allocation6], 512
        $region96: #{worm_vae_forward.1} parent=83 // pred_fallthru
          _
        %p823 = scmp.lt.s32.totalorder %s59, 1
        %s824 = scalar_select %p823, %s59, 1
        %s825 = smul.addr %s824, 4
        %s826 = scalar_lea.vmem %s0, %s825
        %p827 = pneg %p80
        %p828 = pneg %p77
        %p829 = scmp.lt.s32.totalorder %s59, 1
        %s830 = scalar_select %p829, %s59, 1
        %s831 = smul.addr %s830, 2
        %s832 = smul.addr %s831, 8
        %s833 = scalar_lea.vmem %s1, %s832
        %p834 = pneg %p106
        %p835 = pneg %p103
        %p836 = scmp.lt.s32.totalorder %s59, 1
        %s837 = scalar_select %p836, %s59, 1
        %s838 = smul.addr %s837, 2
        %s839 = smul.addr %s838, 8
        %s840 = scalar_lea.vmem %s2, %s839
        %p841 = pneg %p132
        %p842 = pneg %p129
        %p843 = scmp.lt.s32.totalorder %s59, 1
        %s844 = scalar_select %p843, %s59, 1
        %s845 = smul.addr %s844, 2
        %s846 = smul.addr %s845, 8
        %s847 = scalar_lea.vmem %s3, %s846
        %p848 = pneg %p158
        %p849 = pneg %p155
        %s850 = sand.u32 %s171, 1
        %s851 = scalar_lea.sflag [#allocation3], %s850
        %s852 = sand.u32 %s171, 1
        %s853 = smul.addr %s852, 16
        %s854 = scalar_lea.vmem [#allocation2], %s853
        %p855 = pneg %p184
        %p856 = pneg %p181
        %p857 = pneg %p205
        %p858 = pneg %p202
        %p859 = pneg %p226
        %p860 = pneg %p223
        %p861 = pneg %p247
        %p862 = pneg %p244
        %p863 = pneg %p268
        %p864 = pneg %p265
        %p865 = pneg %p289
        %p866 = pneg %p286
        %p867 = pneg %p310
        %p868 = pneg %p307
        %p869 = pneg %p331
        %p870 = pneg %p328
        %p871 = pneg %p352
        %p872 = pneg %p349
        %p873 = pneg %p373
        %p874 = pneg %p370
        %p875 = pneg %p394
        %p876 = pneg %p391
        %p877 = pneg %p415
        %p878 = pneg %p412
        %p879 = pneg %p441
        %p880 = pneg %p438
        %s881 = sand.u32 %s428, 1
        %s882 = scalar_lea.sflag [#allocation4], %s881
        %s883 = sand.u32 %s428, 1
        %s884 = smul.addr %s883, 16
        %s885 = scalar_lea.vmem [#allocation8], %s884
        %p886 = pneg %p467
        %p887 = pneg %p464
        %s888 = sand.u32 %s59, 1
        %s889 = scalar_lea.sflag [#allocation10], %s888
        %s890 = sand.u32 %s454, 1
        %s891 = smul.addr %s890, 16
        %s892 = scalar_lea.vmem [#allocation9], %s891
        %p893 = pneg %p493
        %p894 = pneg %p490
        %s895 = sand.u32 %s59, 1
        %s896 = scalar_lea.sflag [#allocation10], %s895
        %s897 = sand.u32 %s480, 1
        %s898 = smul.addr %s897, 16
        %s899 = scalar_lea.vmem [#allocation11], %s898
        %p900 = pneg %p519
        %p901 = pneg %p516
        %s902 = sand.u32 %s59, 1
        %s903 = scalar_lea.sflag [#allocation13], %s902
        %s904 = sand.u32 %s506, 1
        %s905 = smul.addr %s904, 16
        %s906 = scalar_lea.vmem [#allocation12], %s905
        %p907 = pneg %p545
        %p908 = pneg %p542
        %s909 = sand.u32 %s59, 1
        %s910 = scalar_lea.sflag [#allocation13], %s909
        %s911 = sand.u32 %s532, 1
        %s912 = smul.addr %s911, 16
        %s913 = scalar_lea.vmem [#allocation14], %s912
        %p914 = pneg %p571
        %p915 = pneg %p568
        %s916 = sand.u32 %s59, 1
        %s917 = scalar_lea.sflag [#allocation16], %s916
        %s918 = sand.u32 %s558, 1
        %s919 = smul.addr %s918, 16
        %s920 = scalar_lea.vmem [#allocation15], %s919
        %p921 = pneg %p597
        %p922 = pneg %p594
        %s923 = sand.u32 %s59, 1
        %s924 = scalar_lea.sflag [#allocation16], %s923
        %s925 = sand.u32 %s584, 1
        %s926 = smul.addr %s925, 16
        %s927 = scalar_lea.vmem [#allocation17], %s926
        %p928 = pneg %p623
        %p929 = pneg %p620
        %s930 = sand.u32 %s59, 1
        %s931 = scalar_lea.sflag [#allocation19], %s930
        %s932 = sand.u32 %s610, 1
        %s933 = smul.addr %s932, 16
        %s934 = scalar_lea.vmem [#allocation18], %s933
        %p935 = pneg %p649
        %p936 = pneg %p646
        %s937 = sand.u32 %s59, 1
        %s938 = scalar_lea.sflag [#allocation19], %s937
        %s939 = sand.u32 %s636, 1
        %s940 = smul.addr %s939, 16
        %s941 = scalar_lea.vmem [#allocation20], %s940
        %p942 = pneg %p675
        %p943 = pneg %p672
        %s944 = sand.u32 %s662, 1
        %s945 = scalar_lea.sflag [#allocation22], %s944
        %s946 = sand.u32 %s662, 1
        %s947 = smul.addr %s946, 16
        %s948 = scalar_lea.vmem [#allocation21], %s947
        %p949 = scmp.lt.s32.totalorder %s59, 1
        %s950 = scalar_select %p949, %s59, 1
        %s951 = smul.addr %s950, 4
        %s952 = scalar_lea.vmem %s0, %s951
        %p953 = scmp.lt.s32.totalorder %s59, 1
        %s954 = scalar_select %p953, %s59, 1
        %s955 = smul.addr %s954, 2
        %s956 = smul.addr %s955, 8
        %s957 = scalar_lea.vmem %s1, %s956
        %p958 = scmp.lt.s32.totalorder %s59, 1
        %s959 = scalar_select %p958, %s59, 1
        %s960 = smul.addr %s959, 2
        %s961 = smul.addr %s960, 8
        %s962 = scalar_lea.vmem %s2, %s961
        %p963 = scmp.lt.s32.totalorder %s59, 1
        %s964 = scalar_select %p963, %s59, 1
        %s965 = smul.addr %s964, 2
        %s966 = smul.addr %s965, 8
        %s967 = scalar_lea.vmem %s3, %s966
        %v968 = vld [vmem:[%s13] sm:$0xff]
        %v969 = vld [vmem:[%s13 + $0x8] sm:$0xff]
        %v970 = vld [vmem:[%s5] sm:$0xff]
        %v971 = vld [vmem:[%s5 + $0x8] sm:$0xff]
        %v972 = vld [vmem:[%s5 + $0x10] sm:$0xff]
        %v973 = vld [vmem:[%s5 + $0x18] sm:$0xff]
        %v974 = vld [vmem:[%s952] sm:$0xf]
        %v975 = vld [vmem:[%s6] sm:$0xff]
        %v976 = vld [vmem:[%s6 + $0x8] sm:$0xff]
        %v977 = vld [vmem:[%s6 + $0x10] sm:$0xff]
        %v978 = vld [vmem:[%s6 + $0x18] sm:$0xff]
        %980 = vset.pattern.permute.xlu0 0
        %981 = vperm.xlu0 %980, %v975
        %v982 = vpop.permute.xlu0 %981
        %985 = vset.pattern.permute.xlu0 0
        %986 = vperm.xlu0 %985, %v976
        %v987 = vpop.permute.xlu0 %986
        %990 = vset.pattern.permute.xlu0 0
        %991 = vperm.xlu0 %990, %v977
        %v992 = vpop.permute.xlu0 %991
        %995 = vset.pattern.permute.xlu0 0
        %996 = vperm.xlu0 %995, %v978
        %v997 = vpop.permute.xlu0 %996
        %vm999 = vcmask 31744
        %v1001 = vsel %vm999, %v970, 0
        %v1004 = vsel %vm999, %v971, 0
        %v1007 = vsel %vm999, %v972, 0
        %v1010 = vsel %vm999, %v973, 0
        %vm1012 = vcmask 1043456
        %v1014 = vsel %vm1012, %v974, 0
        %1016 = vmatprep.subr.mxu0 0.0
        %1017 = vmatpush1.msra.mxu0 %v1014
        %1018 = vmatprep.subr.mxu0 0.0
        %1019 = vmatpush1.msra.mxu0 0.0
        %1020 = vmatprep.subr.mxu0 0.0
        %1021 = vmatpush1.msra.mxu0 0.0
        %1022 = vmatprep.subr.mxu0 0.0
        %1023 = vmatpush1.msra.mxu0 0.0
        %1024 = vmatprep.subr.mxu0 0.0
        %1025 = vmatpush1.msra.mxu0 0.0
        %1026 = vmatprep.subr.mxu0 0.0
        %1027 = vmatpush1.msra.mxu0 0.0
        %1028 = vmatprep.subr.mxu0 0.0
        %1029 = vmatpush1.msra.mxu0 0.0
        %1030 = vmatprep.subr.mxu0 0.0
        %1031 = vmatpush1.msra.mxu0 0.0
        %1032 = vmatprep.subr.mxu0 0.0
        %1033 = vmatpush1.msra.mxu0 0.0
        %1034 = vmatprep.subr.mxu0 0.0
        %1035 = vmatpush1.msra.mxu0 0.0
        %1036 = vmatprep.subr.mxu0 0.0
        %1037 = vmatpush1.msra.mxu0 0.0
        %1038 = vmatprep.subr.mxu0 0.0
        %1039 = vmatpush1.msra.mxu0 0.0
        %1040 = vmatprep.subr.mxu0 0.0
        %1041 = vmatpush1.msra.mxu0 0.0
        %1042 = vmatprep.subr.mxu0 0.0
        %1043 = vmatpush1.msra.mxu0 0.0
        %1044 = vmatprep.subr.mxu0 0.0
        %1045 = vmatpush1.msra.mxu0 0.0
        %1046 = vmatprep.subr.mxu0 0.0
        %1047 = vmatpush1.msra.mxu0 0.0
        %1048 = vmatprep.subr.mxu0 0.0
        %1049 = vmatpush1.msra.mxu0 0.0
        %1050 = vmatprep.subr.mxu0 0.0
        %1051 = vmatpush1.msra.mxu0 0.0
        %1052 = vmatprep.subr.mxu0 0.0
        %1053 = vmatpush1.msra.mxu0 0.0
        %1054 = vmatprep.subr.mxu0 0.0
        %1055 = vmatpush1.msra.mxu0 0.0
        %1056 = vmatprep.subr.mxu0 0.0
        %1057 = vmatpush1.msra.mxu0 0.0
        %1058 = vmatprep.subr.mxu0 0.0
        %1059 = vmatpush1.msra.mxu0 0.0
        %1060 = vmatprep.subr.mxu0 0.0
        %1061 = vmatpush1.msra.mxu0 0.0
        %1062 = vmatprep.subr.mxu0 0.0
        %1063 = vmatpush1.msra.mxu0 0.0
        %1064 = vmatprep.subr.mxu0 0.0
        %1065 = vmatpush1.msra.mxu0 0.0
        %1066 = vmatprep.subr.mxu0 0.0
        %1067 = vmatpush1.msra.mxu0 0.0
        %1068 = vmatprep.subr.mxu0 0.0
        %1069 = vmatpush1.msra.mxu0 0.0
        %1070 = vmatprep.subr.mxu0 0.0
        %1071 = vmatpush1.msra.mxu0 0.0
        %1072 = vmatprep.subr.mxu0 0.0
        %1073 = vmatpush1.msra.mxu0 0.0
        %1074 = vmatprep.subr.mxu0 0.0
        %1075 = vmatpush1.msra.mxu0 0.0
        %1076 = vmatprep.subr.mxu0 0.0
        %1077 = vmatpush1.msra.mxu0 0.0
        %1078 = vmatprep.subr.mxu0 0.0
        %1079 = vmatpush1.msra.mxu0 0.0
        %1080 = vmatprep.mubr.f32.mxu0 0.0
        %1081 = vmatmul.mubr.f32.gmra.mrb[0].mxu0 %v1001
        %v1082 = vpop.f32.mrb[0].mxu0
        %v1083 = vadd.f32 %v982, %v1082
        %v1084 = vpop.f32.mrb[0].mxu0
        %1085 = vmatprep.mubr.f32.mxu0 0.0
        %1086 = vmatmul.mubr.f32.gmra.mrb[0].mxu0 %v1004
        %v1087 = vpop.f32.mrb[0].mxu0
        %v1088 = vadd.f32 %v987, %v1087
        %v1089 = vpop.f32.mrb[0].mxu0
        %1090 = vmatprep.mubr.f32.mxu0 0.0
        %1091 = vmatmul.mubr.f32.gmra.mrb[0].mxu0 %v1007
        %v1092 = vpop.f32.mrb[0].mxu0
        %v1093 = vadd.f32 %v992, %v1092
        %v1094 = vpop.f32.mrb[0].mxu0
        %1095 = vmatprep.mubr.f32.mxu0 0.0
        %1096 = vmatmul.mubr.f32.gmra.mrb[0].mxu0 %v1010
        %v1097 = vpop.f32.mrb[0].mxu0
        %v1098 = vadd.f32 %v997, %v1097
        %v1099 = vpop.f32.mrb[0].mxu0
        %1100 = vdwg.mxu0
        %v1101 = vmax.f32 %v1083, 0.0
        %v1102 = vmax.f32 %v1088, 0.0
        %v1103 = vmax.f32 %v1093, 0.0
        %v1104 = vmax.f32 %v1098, 0.0
        %v1105 = vld [vmem:[#allocation5] sm:$0xff]
        %v1106 = vld [vmem:[#allocation5 + $0x8] sm:$0xff]
        %v1107 = vld [vmem:[%s8] sm:$0xff]
        %v1108 = vld [vmem:[%s8 + $0x8] sm:$0xff]
        %1110 = vset.pattern.permute.xlu0 0
        %1111 = vperm.xlu0 %1110, %v1107
        %v1112 = vpop.permute.xlu0 %1111
        %1115 = vset.pattern.permute.xlu0 0
        %1116 = vperm.xlu0 %1115, %v1108
        %v1117 = vpop.permute.xlu0 %1116
        %vm1119 = vcmask 261120
        %v1121 = vsel %vm1119, %v1105, 0
        %v1124 = vsel %vm1119, %v1106, 0
        %1126 = vmatprep.subr.mxu0 0.0
        %1127 = vmatpush1.msra.mxu0 %v1101
        %1128 = vmatprep.subr.mxu0 0.0
        %1129 = vmatpush1.msra.mxu0 %v1102
        %1130 = vmatprep.subr.mxu0 0.0
        %1131 = vmatpush1.msra.mxu0 %v1103
        %1132 = vmatprep.subr.mxu0 0.0
        %1133 = vmatpush1.msra.mxu0 %v1104
        %1134 = vmatprep.subr.mxu0 0.0
        %1135 = vmatpush1.msra.mxu0 0.0
        %1136 = vmatprep.subr.mxu0 0.0
        %1137 = vmatpush1.msra.mxu0 0.0
        %1138 = vmatprep.subr.mxu0 0.0
        %1139 = vmatpush1.msra.mxu0 0.0
        %1140 = vmatprep.subr.mxu0 0.0
        %1141 = vmatpush1.msra.mxu0 0.0
        %1142 = vmatprep.subr.mxu0 0.0
        %1143 = vmatpush1.msra.mxu0 0.0
        %1144 = vmatprep.subr.mxu0 0.0
        %1145 = vmatpush1.msra.mxu0 0.0
        %1146 = vmatprep.subr.mxu0 0.0
        %1147 = vmatpush1.msra.mxu0 0.0
        %1148 = vmatprep.subr.mxu0 0.0
        %1149 = vmatpush1.msra.mxu0 0.0
        %1150 = vmatprep.subr.mxu0 0.0
        %1151 = vmatpush1.msra.mxu0 0.0
        %1152 = vmatprep.subr.mxu0 0.0
        %1153 = vmatpush1.msra.mxu0 0.0
        %1154 = vmatprep.subr.mxu0 0.0
        %1155 = vmatpush1.msra.mxu0 0.0
        %1156 = vmatprep.subr.mxu0 0.0
        %1157 = vmatpush1.msra.mxu0 0.0
        %1158 = vmatprep.subr.mxu0 0.0
        %1159 = vmatpush1.msra.mxu0 0.0
        %1160 = vmatprep.subr.mxu0 0.0
        %1161 = vmatpush1.msra.mxu0 0.0
        %1162 = vmatprep.subr.mxu0 0.0
        %1163 = vmatpush1.msra.mxu0 0.0
        %1164 = vmatprep.subr.mxu0 0.0
        %1165 = vmatpush1.msra.mxu0 0.0
        %1166 = vmatprep.subr.mxu0 0.0
        %1167 = vmatpush1.msra.mxu0 0.0
        %1168 = vmatprep.subr.mxu0 0.0
        %1169 = vmatpush1.msra.mxu0 0.0
        %1170 = vmatprep.subr.mxu0 0.0
        %1171 = vmatpush1.msra.mxu0 0.0
        %1172 = vmatprep.subr.mxu0 0.0
        %1173 = vmatpush1.msra.mxu0 0.0
        %1174 = vmatprep.subr.mxu0 0.0
        %1175 = vmatpush1.msra.mxu0 0.0
        %1176 = vmatprep.subr.mxu0 0.0
        %1177 = vmatpush1.msra.mxu0 0.0
        %1178 = vmatprep.subr.mxu0 0.0
        %1179 = vmatpush1.msra.mxu0 0.0
        %1180 = vmatprep.subr.mxu0 0.0
        %1181 = vmatpush1.msra.mxu0 0.0
        %1182 = vmatprep.subr.mxu0 0.0
        %1183 = vmatpush1.msra.mxu0 0.0
        %1184 = vmatprep.subr.mxu0 0.0
        %1185 = vmatpush1.msra.mxu0 0.0
        %1186 = vmatprep.subr.mxu0 0.0
        %1187 = vmatpush1.msra.mxu0 0.0
        %1188 = vmatprep.subr.mxu0 0.0
        %1189 = vmatpush1.msra.mxu0 0.0
        %1190 = vmatprep.mubr.f32.mxu0 0.0
        %1191 = vmatmul.mubr.f32.gmra.mrb[0].mxu0 %v1121
        %v1192 = vpop.f32.mrb[0].mxu0
        %v1193 = vadd.f32 %v1112, %v1192
        %v1194 = vpop.f32.mrb[0].mxu0
        %1195 = vmatprep.mubr.f32.mxu0 0.0
        %1196 = vmatmul.mubr.f32.gmra.mrb[0].mxu0 %v1124
        %v1197 = vpop.f32.mrb[0].mxu0
        %v1198 = vadd.f32 %v1117, %v1197
        %v1199 = vpop.f32.mrb[0].mxu0
        %1200 = vdwg.mxu0
        %v1201 = vld [vmem:[%s9] sm:$0xff]
        %v1202 = vld [vmem:[%s9 + $0x8] sm:$0xff]
        %1204 = vset.pattern.permute.xlu0 0
        %1205 = vperm.xlu0 %1204, %v1201
        %v1206 = vpop.permute.xlu0 %1205
        %1209 = vset.pattern.permute.xlu0 0
        %1210 = vperm.xlu0 %1209, %v1202
        %v1211 = vpop.permute.xlu0 %1210
        %v1213 = vmul.f32 %v1193, %v1206
        %v1214 = vmul.f32 %v1198, %v1211
        %v1215 = vld [vmem:[%s957] sm:$0xff]
        %v1216 = vld [vmem:[%s957 + $0x8] sm:$0xff]
        %v1217 = vld [vmem:[%s962] sm:$0xff]
        %v1218 = vld [vmem:[%s962 + $0x8] sm:$0xff]
        %1225 = vrot.lane.b32.xlu0 %v1215, 127
        %v1226 = vpop.permute.xlu0 %1225
        %1227 = vrot.lane.b32.xlu0 %v1216, 127
        %v1228 = vpop.permute.xlu0 %1227
        %1229 = vrot.lane.b32.xlu0 %v1217, 127
        %v1230 = vpop.permute.xlu0 %1229
        %1231 = vrot.lane.b32.xlu0 %v1218, 127
        %v1232 = vpop.permute.xlu0 %1231
        %1233 = vrot.lane.b32.xlu0 %v1213, 127
        %v1234 = vpop.permute.xlu0 %1233
        %1235 = vrot.lane.b32.xlu0 %v1214, 127
        %v1236 = vpop.permute.xlu0 %1235
        %1243 = vrot.lane.b32.xlu0 %v1215, 126
        %v1244 = vpop.permute.xlu0 %1243
        %1245 = vrot.lane.b32.xlu0 %v1216, 126
        %v1246 = vpop.permute.xlu0 %1245
        %1247 = vrot.lane.b32.xlu0 %v1217, 126
        %v1248 = vpop.permute.xlu0 %1247
        %1249 = vrot.lane.b32.xlu0 %v1218, 126
        %v1250 = vpop.permute.xlu0 %1249
        %1251 = vrot.lane.b32.xlu0 %v1213, 126
        %v1252 = vpop.permute.xlu0 %1251
        %1253 = vrot.lane.b32.xlu0 %v1214, 126
        %v1254 = vpop.permute.xlu0 %1253
        %1261 = vrot.lane.b32.xlu0 %v1215, 125
        %v1262 = vpop.permute.xlu0 %1261
        %1263 = vrot.lane.b32.xlu0 %v1216, 125
        %v1264 = vpop.permute.xlu0 %1263
        %1265 = vrot.lane.b32.xlu0 %v1217, 125
        %v1266 = vpop.permute.xlu0 %1265
        %1267 = vrot.lane.b32.xlu0 %v1218, 125
        %v1268 = vpop.permute.xlu0 %1267
        %1269 = vrot.lane.b32.xlu0 %v1213, 125
        %v1270 = vpop.permute.xlu0 %1269
        %1271 = vrot.lane.b32.xlu0 %v1214, 125
        %v1272 = vpop.permute.xlu0 %1271
        %1279 = vrot.lane.b32.xlu0 %v1215, 124
        %v1280 = vpop.permute.xlu0 %1279
        %1281 = vrot.lane.b32.xlu0 %v1216, 124
        %v1282 = vpop.permute.xlu0 %1281
        %1283 = vrot.lane.b32.xlu0 %v1217, 124
        %v1284 = vpop.permute.xlu0 %1283
        %1285 = vrot.lane.b32.xlu0 %v1218, 124
        %v1286 = vpop.permute.xlu0 %1285
        %1287 = vrot.lane.b32.xlu0 %v1213, 124
        %v1288 = vpop.permute.xlu0 %1287
        %1289 = vrot.lane.b32.xlu0 %v1214, 124
        %v1290 = vpop.permute.xlu0 %1289
        %1297 = vrot.lane.b32.xlu0 %v1215, 123
        %v1298 = vpop.permute.xlu0 %1297
        %1299 = vrot.lane.b32.xlu0 %v1216, 123
        %v1300 = vpop.permute.xlu0 %1299
        %1301 = vrot.lane.b32.xlu0 %v1217, 123
        %v1302 = vpop.permute.xlu0 %1301
        %1303 = vrot.lane.b32.xlu0 %v1218, 123
        %v1304 = vpop.permute.xlu0 %1303
        %1305 = vrot.lane.b32.xlu0 %v1213, 123
        %v1306 = vpop.permute.xlu0 %1305
        %1307 = vrot.lane.b32.xlu0 %v1214, 123
        %v1308 = vpop.permute.xlu0 %1307
        %1315 = vrot.lane.b32.xlu0 %v1215, 122
        %v1316 = vpop.permute.xlu0 %1315
        %1317 = vrot.lane.b32.xlu0 %v1216, 122
        %v1318 = vpop.permute.xlu0 %1317
        %1319 = vrot.lane.b32.xlu0 %v1217, 122
        %v1320 = vpop.permute.xlu0 %1319
        %1321 = vrot.lane.b32.xlu0 %v1218, 122
        %v1322 = vpop.permute.xlu0 %1321
        %1323 = vrot.lane.b32.xlu0 %v1213, 122
        %v1324 = vpop.permute.xlu0 %1323
        %1325 = vrot.lane.b32.xlu0 %v1214, 122
        %v1326 = vpop.permute.xlu0 %1325
        %1333 = vrot.lane.b32.xlu0 %v1215, 121
        %v1334 = vpop.permute.xlu0 %1333
        %1335 = vrot.lane.b32.xlu0 %v1216, 121
        %v1336 = vpop.permute.xlu0 %1335
        %1337 = vrot.lane.b32.xlu0 %v1217, 121
        %v1338 = vpop.permute.xlu0 %1337
        %1339 = vrot.lane.b32.xlu0 %v1218, 121
        %v1340 = vpop.permute.xlu0 %1339
        %1341 = vrot.lane.b32.xlu0 %v1213, 121
        %v1342 = vpop.permute.xlu0 %1341
        %1343 = vrot.lane.b32.xlu0 %v1214, 121
        %v1344 = vpop.permute.xlu0 %1343
        %1351 = vrot.lane.b32.xlu0 %v1215, 120
        %v1352 = vpop.permute.xlu0 %1351
        %1353 = vrot.lane.b32.xlu0 %v1216, 120
        %v1354 = vpop.permute.xlu0 %1353
        %1355 = vrot.lane.b32.xlu0 %v1217, 120
        %v1356 = vpop.permute.xlu0 %1355
        %1357 = vrot.lane.b32.xlu0 %v1218, 120
        %v1358 = vpop.permute.xlu0 %1357
        %1359 = vrot.lane.b32.xlu0 %v1213, 120
        %v1360 = vpop.permute.xlu0 %1359
        %1361 = vrot.lane.b32.xlu0 %v1214, 120
        %v1362 = vpop.permute.xlu0 %1361
        %v1369 = vld [vmem:[%s10] sm:$0xff]
        %v1370 = vld [vmem:[%s10 + $0x8] sm:$0xff]
        %v1371 = vld [vmem:[%s10 + $0x10] sm:$0xff]
        %v1372 = vld [vmem:[%s10 + $0x18] sm:$0xff]
        %v1373 = vld [vmem:[%s10 + $0x20] sm:$0xff]
        %v1374 = vld [vmem:[%s10 + $0x28] sm:$0xff]
        %v1375 = vld [vmem:[%s10 + $0x30] sm:$0xff]
        %v1376 = vld [vmem:[%s10 + $0x38] sm:$0xff]
        %v1377 = vld [vmem:[%s10 + $0x40] sm:$0xff]
        %v1378 = vld [vmem:[%s10 + $0x48] sm:$0xff]
        %v1379 = vld [vmem:[%s10 + $0x50] sm:$0xff]
        %v1380 = vld [vmem:[%s10 + $0x58] sm:$0xff]
        %v1381 = vld [vmem:[%s10 + $0x60] sm:$0xff]
        %v1382 = vld [vmem:[%s10 + $0x68] sm:$0xff]
        %v1383 = vld [vmem:[%s10 + $0x70] sm:$0xff]
        %v1384 = vld [vmem:[%s10 + $0x78] sm:$0xff]
        %v1385 = vld [vmem:[%s11] sm:$0xff]
        %v1386 = vld [vmem:[%s11 + $0x8] sm:$0xff]
        %v1387 = vld [vmem:[%s11 + $0x10] sm:$0xff]
        %v1388 = vld [vmem:[%s11 + $0x18] sm:$0xff]
        %1390 = vset.pattern.permute.xlu0 0
        %1391 = vperm.xlu0 %1390, %v1385
        %v1392 = vpop.permute.xlu0 %1391
        %1395 = vset.pattern.permute.xlu0 0
        %1396 = vperm.xlu0 %1395, %v1386
        %v1397 = vpop.permute.xlu0 %1396
        %1400 = vset.pattern.permute.xlu0 0
        %1401 = vperm.xlu0 %1400, %v1387
        %v1402 = vpop.permute.xlu0 %1401
        %1405 = vset.pattern.permute.xlu0 0
        %1406 = vperm.xlu0 %1405, %v1388
        %v1407 = vpop.permute.xlu0 %1406
        %vm1409 = vcmask 392192
        %v1411 = vsel %vm1409, %v1372, 0
        %v1414 = vsel %vm1409, %v1376, 0
        %v1417 = vsel %vm1409, %v1380, 0
        %v1420 = vsel %vm1409, %v1384, 0
        %1422 = vmatprep.subr.mxu0 0.0
        %1423 = vmatpush1.msra.mxu0 %v1215
        %1424 = vmatprep.subr.mxu0 0.0
        %1425 = vmatpush1.msra.mxu0 %v1216
        %1426 = vmatprep.subr.mxu0 0.0
        %1427 = vmatpush1.msra.mxu0 %v1217
        %1428 = vmatprep.subr.mxu0 0.0
        %1429 = vmatpush1.msra.mxu0 %v1218
        %1430 = vmatprep.subr.mxu0 0.0
        %1431 = vmatpush1.msra.mxu0 %v1213
        %1432 = vmatprep.subr.mxu0 0.0
        %1433 = vmatpush1.msra.mxu0 %v1214
        %1434 = vmatprep.subr.mxu0 0.0
        %1435 = vmatpush1.msra.mxu0 %v1226
        %1436 = vmatprep.subr.mxu0 0.0
        %1437 = vmatpush1.msra.mxu0 %v1228
        %1438 = vmatprep.subr.mxu0 0.0
        %1439 = vmatpush1.msra.mxu0 %v1230
        %1440 = vmatprep.subr.mxu0 0.0
        %1441 = vmatpush1.msra.mxu0 %v1232
        %1442 = vmatprep.subr.mxu0 0.0
        %1443 = vmatpush1.msra.mxu0 %v1234
        %1444 = vmatprep.subr.mxu0 0.0
        %1445 = vmatpush1.msra.mxu0 %v1236
        %1446 = vmatprep.subr.mxu0 0.0
        %1447 = vmatpush1.msra.mxu0 %v1244
        %1448 = vmatprep.subr.mxu0 0.0
        %1449 = vmatpush1.msra.mxu0 %v1246
        %1450 = vmatprep.subr.mxu0 0.0
        %1451 = vmatpush1.msra.mxu0 %v1248
        %1452 = vmatprep.subr.mxu0 0.0
        %1453 = vmatpush1.msra.mxu0 %v1250
        %1454 = vmatprep.subr.mxu0 0.0
        %1455 = vmatpush1.msra.mxu0 %v1252
        %1456 = vmatprep.subr.mxu0 0.0
        %1457 = vmatpush1.msra.mxu0 %v1254
        %1458 = vmatprep.subr.mxu0 0.0
        %1459 = vmatpush1.msra.mxu0 %v1262
        %1460 = vmatprep.subr.mxu0 0.0
        %1461 = vmatpush1.msra.mxu0 %v1264
        %1462 = vmatprep.subr.mxu0 0.0
        %1463 = vmatpush1.msra.mxu0 %v1266
        %1464 = vmatprep.subr.mxu0 0.0
        %1465 = vmatpush1.msra.mxu0 %v1268
        %1466 = vmatprep.subr.mxu0 0.0
        %1467 = vmatpush1.msra.mxu0 %v1270
        %1468 = vmatprep.subr.mxu0 0.0
        %1469 = vmatpush1.msra.mxu0 %v1272
        %1470 = vmatprep.subr.mxu0 0.0
        %1471 = vmatpush1.msra.mxu0 %v1280
        %1472 = vmatprep.subr.mxu0 0.0
        %1473 = vmatpush1.msra.mxu0 %v1282
        %1474 = vmatprep.subr.mxu0 0.0
        %1475 = vmatpush1.msra.mxu0 %v1284
        %1476 = vmatprep.subr.mxu0 0.0
        %1477 = vmatpush1.msra.mxu0 %v1286
        %1478 = vmatprep.subr.mxu0 0.0
        %1479 = vmatpush1.msra.mxu0 %v1288
        %1480 = vmatprep.subr.mxu0 0.0
        %1481 = vmatpush1.msra.mxu0 %v1290
        %1482 = vmatprep.subr.mxu0 0.0
        %1483 = vmatpush1.msra.mxu0 %v1298
        %1484 = vmatprep.subr.mxu0 0.0
        %1485 = vmatpush1.msra.mxu0 %v1300
        %1486 = vmatprep.mubr.f32.mxu0 %v1370
        %1487 = vmatmul.mubr.f32.gmra.mrb[0].mxu0 %v1369
        %v1488 = vpop.f32.mrb[0].mxu0
        %v1489 = vadd.f32 %v1392, %v1488
        %v1490 = vpop.f32.mrb[0].mxu0
        %1491 = vmatprep.mubr.f32.mxu0 %v1374
        %1492 = vmatmul.mubr.f32.gmra.mrb[0].mxu0 %v1373
        %v1493 = vpop.f32.mrb[0].mxu0
        %v1494 = vadd.f32 %v1397, %v1493
        %v1495 = vpop.f32.mrb[0].mxu0
        %1496 = vmatprep.mubr.f32.mxu0 %v1378
        %1497 = vmatmul.mubr.f32.gmra.mrb[0].mxu0 %v1377
        %v1498 = vpop.f32.mrb[0].mxu0
        %v1499 = vadd.f32 %v1402, %v1498
        %v1500 = vpop.f32.mrb[0].mxu0
        %1501 = vmatprep.mubr.f32.mxu0 %v1382
        %1502 = vmatmul.mubr.f32.gmra.mrb[0].mxu0 %v1381
        %v1503 = vpop.f32.mrb[0].mxu0
        %v1504 = vadd.f32 %v1407, %v1503
        %v1505 = vpop.f32.mrb[0].mxu0
        %1506 = vdwg.mxu0
        %1507 = vmatprep.subr.mxu0 0.0
        %1508 = vmatpush1.msra.mxu0 %v1302
        %1509 = vmatprep.subr.mxu0 0.0
        %1510 = vmatpush1.msra.mxu0 %v1304
        %1511 = vmatprep.subr.mxu0 0.0
        %1512 = vmatpush1.msra.mxu0 %v1306
        %1513 = vmatprep.subr.mxu0 0.0
        %1514 = vmatpush1.msra.mxu0 %v1308
        %1515 = vmatprep.subr.mxu0 0.0
        %1516 = vmatpush1.msra.mxu0 %v1316
        %1517 = vmatprep.subr.mxu0 0.0
        %1518 = vmatpush1.msra.mxu0 %v1318
        %1519 = vmatprep.subr.mxu0 0.0
        %1520 = vmatpush1.msra.mxu0 %v1320
        %1521 = vmatprep.subr.mxu0 0.0
        %1522 = vmatpush1.msra.mxu0 %v1322
        %1523 = vmatprep.subr.mxu0 0.0
        %1524 = vmatpush1.msra.mxu0 %v1324
        %1525 = vmatprep.subr.mxu0 0.0
        %1526 = vmatpush1.msra.mxu0 %v1326
        %1527 = vmatprep.subr.mxu0 0.0
        %1528 = vmatpush1.msra.mxu0 %v1334
        %1529 = vmatprep.subr.mxu0 0.0
        %1530 = vmatpush1.msra.mxu0 %v1336
        %1531 = vmatprep.subr.mxu0 0.0
        %1532 = vmatpush1.msra.mxu0 %v1338
        %1533 = vmatprep.subr.mxu0 0.0
        %1534 = vmatpush1.msra.mxu0 %v1340
        %1535 = vmatprep.subr.mxu0 0.0
        %1536 = vmatpush1.msra.mxu0 %v1342
        %1537 = vmatprep.subr.mxu0 0.0
        %1538 = vmatpush1.msra.mxu0 %v1344
        %1539 = vmatprep.subr.mxu0 0.0
        %1540 = vmatpush1.msra.mxu0 %v1352
        %1541 = vmatprep.subr.mxu0 0.0
        %1542 = vmatpush1.msra.mxu0 %v1354
        %1543 = vmatprep.subr.mxu0 0.0
        %1544 = vmatpush1.msra.mxu0 %v1356
        %1545 = vmatprep.subr.mxu0 0.0
        %1546 = vmatpush1.msra.mxu0 %v1358
        %1547 = vmatprep.subr.mxu0 0.0
        %1548 = vmatpush1.msra.mxu0 %v1360
        %1549 = vmatprep.subr.mxu0 0.0
        %1550 = vmatpush1.msra.mxu0 %v1362
        %1551 = vmatprep.subr.mxu0 0.0
        %1552 = vmatpush1.msra.mxu0 0.0
        %1553 = vmatprep.subr.mxu0 0.0
        %1554 = vmatpush1.msra.mxu0 0.0
        %1555 = vmatprep.subr.mxu0 0.0
        %1556 = vmatpush1.msra.mxu0 0.0
        %1557 = vmatprep.subr.mxu0 0.0
        %1558 = vmatpush1.msra.mxu0 0.0
        %1559 = vmatprep.subr.mxu0 0.0
        %1560 = vmatpush1.msra.mxu0 0.0
        %1561 = vmatprep.subr.mxu0 0.0
        %1562 = vmatpush1.msra.mxu0 0.0
        %1563 = vmatprep.subr.mxu0 0.0
        %1564 = vmatpush1.msra.mxu0 0.0
        %1565 = vmatprep.subr.mxu0 0.0
        %1566 = vmatpush1.msra.mxu0 0.0
        %1567 = vmatprep.subr.mxu0 0.0
        %1568 = vmatpush1.msra.mxu0 0.0
        %1569 = vmatprep.subr.mxu0 0.0
        %1570 = vmatpush1.msra.mxu0 0.0
        %1571 = vmatprep.mubr.f32.mxu0 %v1411
        %1572 = vmatmul.mubr.f32.gmra.mrb[0].mxu0 %v1371
        %v1573 = vpop.f32.mrb[0].mxu0
        %v1574 = vadd.f32 %v1489, %v1573
        %v1575 = vpop.f32.mrb[0].mxu0
        %1576 = vmatprep.mubr.f32.mxu0 %v1414
        %1577 = vmatmul.mubr.f32.gmra.mrb[0].mxu0 %v1375
        %v1578 = vpop.f32.mrb[0].mxu0
        %v1579 = vadd.f32 %v1494, %v1578
        %v1580 = vpop.f32.mrb[0].mxu0
        %1581 = vmatprep.mubr.f32.mxu0 %v1417
        %1582 = vmatmul.mubr.f32.gmra.mrb[0].mxu0 %v1379
        %v1583 = vpop.f32.mrb[0].mxu0
        %v1584 = vadd.f32 %v1499, %v1583
        %v1585 = vpop.f32.mrb[0].mxu0
        %1586 = vmatprep.mubr.f32.mxu0 %v1420
        %1587 = vmatmul.mubr.f32.gmra.mrb[0].mxu0 %v1383
        %v1588 = vpop.f32.mrb[0].mxu0
        %v1589 = vadd.f32 %v1504, %v1588
        %v1590 = vpop.f32.mrb[0].mxu0
        %1591 = vdwg.mxu0
        %v1592 = vmul.f32 %v1584, 0.5
        %v1593 = vmul.f32 %v1589, 0.5
        %v1594 = vmul.f32 %v1592, 1.442695
        %v1595 = vpow.pop %v1594
        %v1596 = vmul.f32 %v1593, 1.442695
        %v1597 = vpow.pop %v1596
        %v1598 = vld [vmem:[%s810] sm:$0xff]
        %v1599 = vld [vmem:[%s810 + $0x8] sm:$0xff]
        %v1600 = vmul.f32 %v1595, %v1598
        %v1601 = vmul.f32 %v1597, %v1599
        %v1602 = vadd.f32 %v1574, %v1600
        %v1603 = vadd.f32 %v1579, %v1601
        %vm1604 = vcmask 130048
        %1605 = vst.msk [vmem:[%s885] sm:$0xff] %vm1604, %v1574
        %1606 = vst.msk [vmem:[%s885 + $0x8] sm:$0xff] %vm1604, %v1579
        %1607 = vst.msk [vmem:[%s892] sm:$0xff] %vm1604, %v1584
        %1608 = vst.msk [vmem:[%s892 + $0x8] sm:$0xff] %vm1604, %v1589
        %1609 = vst.msk [vmem:[%s899] sm:$0xff] %vm1604, %v1602
        %1610 = vst.msk [vmem:[%s899 + $0x8] sm:$0xff] %vm1604, %v1603
        %1611 = vst.msk [vmem:[%s941] sm:$0xff] %vm1604, %v1288
        %1612 = vst.msk [vmem:[%s941 + $0x8] sm:$0xff] %vm1604, %v1290
        %v1613 = vtanh.pop %v1602
        %v1614 = vtanh.pop %v1603
        %v1615 = vld [vmem:[#allocation7] sm:$0xff]
        %v1616 = vld [vmem:[#allocation7 + $0x8] sm:$0xff]
        %v1617 = vld [vmem:[#allocation7 + $0x10] sm:$0xff]
        %v1618 = vld [vmem:[#allocation7 + $0x18] sm:$0xff]
        %v1620 = vsel %vm1119, %v1615, 0
        %v1623 = vsel %vm1119, %v1616, 0
        %v1626 = vsel %vm1119, %v1617, 0
        %v1629 = vsel %vm1119, %v1618, 0
        %1631 = vmatprep.subr.mxu0 0.0
        %1632 = vmatpush1.msra.mxu0 %v1613
        %1633 = vmatprep.subr.mxu0 0.0
        %1634 = vmatpush1.msra.mxu0 %v1614
        %1635 = vmatprep.subr.mxu0 0.0
        %1636 = vmatpush1.msra.mxu0 %v1602
        %1637 = vmatprep.subr.mxu0 0.0
        %1638 = vmatpush1.msra.mxu0 %v1603
        %1639 = vmatprep.subr.mxu0 0.0
        %1640 = vmatpush1.msra.mxu0 0.0
        %1641 = vmatprep.subr.mxu0 0.0
        %1642 = vmatpush1.msra.mxu0 0.0
        %1643 = vmatprep.subr.mxu0 0.0
        %1644 = vmatpush1.msra.mxu0 0.0
        %1645 = vmatprep.subr.mxu0 0.0
        %1646 = vmatpush1.msra.mxu0 0.0
        %1647 = vmatprep.subr.mxu0 0.0
        %1648 = vmatpush1.msra.mxu0 0.0
        %1649 = vmatprep.subr.mxu0 0.0
        %1650 = vmatpush1.msra.mxu0 0.0
        %1651 = vmatprep.subr.mxu0 0.0
        %1652 = vmatpush1.msra.mxu0 0.0
        %1653 = vmatprep.subr.mxu0 0.0
        %1654 = vmatpush1.msra.mxu0 0.0
        %1655 = vmatprep.subr.mxu0 0.0
        %1656 = vmatpush1.msra.mxu0 0.0
        %1657 = vmatprep.subr.mxu0 0.0
        %1658 = vmatpush1.msra.mxu0 0.0
        %1659 = vmatprep.subr.mxu0 0.0
        %1660 = vmatpush1.msra.mxu0 0.0
        %1661 = vmatprep.subr.mxu0 0.0
        %1662 = vmatpush1.msra.mxu0 0.0
        %1663 = vmatprep.subr.mxu0 0.0
        %1664 = vmatpush1.msra.mxu0 0.0
        %1665 = vmatprep.subr.mxu0 0.0
        %1666 = vmatpush1.msra.mxu0 0.0
        %1667 = vmatprep.subr.mxu0 0.0
        %1668 = vmatpush1.msra.mxu0 0.0
        %1669 = vmatprep.subr.mxu0 0.0
        %1670 = vmatpush1.msra.mxu0 0.0
        %1671 = vmatprep.subr.mxu0 0.0
        %1672 = vmatpush1.msra.mxu0 0.0
        %1673 = vmatprep.subr.mxu0 0.0
        %1674 = vmatpush1.msra.mxu0 0.0
        %1675 = vmatprep.subr.mxu0 0.0
        %1676 = vmatpush1.msra.mxu0 0.0
        %1677 = vmatprep.subr.mxu0 0.0
        %1678 = vmatpush1.msra.mxu0 0.0
        %1679 = vmatprep.subr.mxu0 0.0
        %1680 = vmatpush1.msra.mxu0 0.0
        %1681 = vmatprep.subr.mxu0 0.0
        %1682 = vmatpush1.msra.mxu0 0.0
        %1683 = vmatprep.subr.mxu0 0.0
        %1684 = vmatpush1.msra.mxu0 0.0
        %1685 = vmatprep.subr.mxu0 0.0
        %1686 = vmatpush1.msra.mxu0 0.0
        %1687 = vmatprep.subr.mxu0 0.0
        %1688 = vmatpush1.msra.mxu0 0.0
        %1689 = vmatprep.subr.mxu0 0.0
        %1690 = vmatpush1.msra.mxu0 0.0
        %1691 = vmatprep.subr.mxu0 0.0
        %1692 = vmatpush1.msra.mxu0 0.0
        %1693 = vmatprep.subr.mxu0 0.0
        %1694 = vmatpush1.msra.mxu0 0.0
        %1695 = vmatprep.mubr.f32.mxu0 0.0
        %1696 = vmatmul.mubr.f32.gmra.mrb[0].mxu0 %v1620
        %v1697 = vpop.f32.mrb[0].mxu0
        %v1698 = vadd.f32 0.0, %v1697
        %v1699 = vpop.f32.mrb[0].mxu0
        %1700 = vmatprep.mubr.f32.mxu0 0.0
        %1701 = vmatmul.mubr.f32.gmra.mrb[0].mxu0 %v1623
        %v1702 = vpop.f32.mrb[0].mxu0
        %v1703 = vadd.f32 0.0, %v1702
        %v1704 = vpop.f32.mrb[0].mxu0
        %1705 = vmatprep.mubr.f32.mxu0 0.0
        %1706 = vmatmul.mubr.f32.gmra.mrb[0].mxu0 %v1626
        %v1707 = vpop.f32.mrb[0].mxu0
        %v1708 = vadd.f32 0.0, %v1707
        %v1709 = vpop.f32.mrb[0].mxu0
        %1710 = vmatprep.mubr.f32.mxu0 0.0
        %1711 = vmatmul.mubr.f32.gmra.mrb[0].mxu0 %v1629
        %v1712 = vpop.f32.mrb[0].mxu0
        %v1713 = vadd.f32 0.0, %v1712
        %v1714 = vpop.f32.mrb[0].mxu0
        %1715 = vdwg.mxu0
        %1717 = vset.pattern.permute.xlu0 0
        %1718 = vperm.xlu0 %1717, %v968
        %v1719 = vpop.permute.xlu0 %1718
        %1722 = vset.pattern.permute.xlu0 0
        %1723 = vperm.xlu0 %1722, %v969
        %v1724 = vpop.permute.xlu0 %1723
        %v1726 = vmul.f32 %v1719, %v1602
        %v1727 = vmul.f32 %v1724, %v1603
        %v1728 = vsub.f32 %v1708, %v1726
        %v1729 = vsub.f32 %v1713, %v1727
        %1730 = vst.msk [vmem:[%s927] sm:$0xff] %vm1604, %v1698
        %1731 = vst.msk [vmem:[%s927 + $0x8] sm:$0xff] %vm1604, %v1703
        %1732 = vst.msk [vmem:[%s934] sm:$0xff] %vm1604, %v1728
        %1733 = vst.msk [vmem:[%s934 + $0x8] sm:$0xff] %vm1604, %v1729
        %v1734 = vrcp.pop %v968
        %v1735 = vmul.f32 0.1, %v1734
        %v1736 = vrcp.pop %v969
        %v1737 = vmul.f32 0.1, %v1736
        %v1738 = vsub.f32 0.0, %v1602
        %v1739 = vsub.f32 0.0, %v1603
        %v1740 = vadd.f32 %v1738, %v1698
        %v1741 = vadd.f32 %v1739, %v1703
        %v1742 = vadd.f32 %v1740, %v1728
        %v1743 = vadd.f32 %v1741, %v1729
        %1744 = vset.pattern.permute.xlu0 2
        %1745 = vperm.xlu0 %1744, %v968
        %v1746 = vpop.permute.xlu0 %1745
        %1748 = vset.pattern.permute.xlu0 2
        %1749 = vperm.xlu0 %1748, %v969
        %v1750 = vpop.permute.xlu0 %1749
        %v1752 = vadd.f32 %v1742, %v1746
        %v1753 = vadd.f32 %v1743, %v1750
        %v1754 = vadd.f32 %v1752, %v1288
        %v1755 = vadd.f32 %v1753, %v1290
        %1757 = vset.pattern.permute.xlu0 1
        %1758 = vperm.xlu0 %1757, %v1735
        %v1759 = vpop.permute.xlu0 %1758
        %1762 = vset.pattern.permute.xlu0 1
        %1763 = vperm.xlu0 %1762, %v1737
        %v1764 = vpop.permute.xlu0 %1763
        %v1766 = vmul.f32 %v1759, %v1754
        %v1767 = vmul.f32 %v1764, %v1755
        %v1768 = vadd.f32 %v1602, %v1766
        %v1769 = vadd.f32 %v1603, %v1767
        %1770 = vst.msk [vmem:[%s920] sm:$0xff] %vm1604, %v1768
        %1771 = vst.msk [vmem:[%s920 + $0x8] sm:$0xff] %vm1604, %v1769
        %1772 = vset.pattern.permute.xlu0 3
        %1773 = vperm.xlu0 %1772, %v968
        %v1774 = vpop.permute.xlu0 %1773
        %1776 = vset.pattern.permute.xlu0 3
        %1777 = vperm.xlu0 %1776, %v969
        %v1778 = vpop.permute.xlu0 %1777
        %v1780 = vmul.f32 %v1774, %v1602
        %v1781 = vmul.f32 %v1778, %v1603
        %1782 = vset.pattern.permute.xlu0 4
        %1783 = vperm.xlu0 %1782, %v968
        %v1784 = vpop.permute.xlu0 %1783
        %1786 = vset.pattern.permute.xlu0 4
        %1787 = vperm.xlu0 %1786, %v969
        %v1788 = vpop.permute.xlu0 %1787
        %v1790 = vadd.f32 %v1780, %v1784
        %v1791 = vadd.f32 %v1781, %v1788
        %v1792 = vmax.f32 %v1790, 0.0
        %v1793 = vmax.f32 %v1791, 0.0
        %vm1794 = vcmp.ne.f32.partialorder %v1790, %v1790
        %vm1795 = vcmp.ne.f32.partialorder %v1791, %v1791
        %v1796 = vadd.f32 %v1790, 0.0
        %v1797 = vadd.f32 %v1791, 0.0
        %v1798 = vand.u32 2147483647, %v1790
        %v1799 = vand.u32 2147483647, %v1791
        %v1800 = vsub.f32 0.0, %v1798
        %v1801 = vsub.f32 0.0, %v1799
        %v1802 = vmul.f32 %v1800, 1.442695
        %v1803 = vpow.pop %v1802
        %v1804 = vmul.f32 %v1801, 1.442695
        %v1805 = vpow.pop %v1804
        %v1806 = vadd.f32 %v1803, 1.0
        %v1807 = vlog2.pop %v1806
        %v1808 = vmul.f32 %v1807, 0.6931472
        %v1809 = vmul.f32 -0.5, %v1803
        %v1810 = vadd.f32 %v1809, 1.0
        %v1811 = vmul.f32 %v1810, %v1803
        %v1812 = vand.u32 2147483647, %v1803
        %vm1813 = vcmp.lt.f32.partialorder %v1812, 0.0004427343
        %v1814 = vsel %vm1813, %v1811, %v1808
        %v1815 = vadd.f32 %v1805, 1.0
        %v1816 = vlog2.pop %v1815
        %v1817 = vmul.f32 %v1816, 0.6931472
        %v1818 = vmul.f32 -0.5, %v1805
        %v1819 = vadd.f32 %v1818, 1.0
        %v1820 = vmul.f32 %v1819, %v1805
        %v1821 = vand.u32 2147483647, %v1805
        %vm1822 = vcmp.lt.f32.partialorder %v1821, 0.0004427343
        %v1823 = vsel %vm1822, %v1820, %v1817
        %v1824 = vadd.f32 %v1792, %v1814
        %v1825 = vadd.f32 %v1793, %v1823
        %v1826 = vsel %vm1794, %v1796, %v1824
        %v1827 = vsel %vm1795, %v1797, %v1825
        %1828 = vst.msk [vmem:[%s948] sm:$0xff] %vm1604, %v1826
        %1829 = vst.msk [vmem:[%s948 + $0x8] sm:$0xff] %vm1604, %v1827
        %v1830 = vld [vmem:[%s967] sm:$0xff]
        %v1831 = vld [vmem:[%s967 + $0x8] sm:$0xff]
        %vm1832 = vcmask 80896
        %v1833 = vsel %vm1832, %v1830, 0.0
        %1834 = vadd.xlane.f32.xlu0 %v1833
        %v1835 = vpop.xlane.xlu0 %1834
        %v1836 = vsel %vm1832, %v1831, 0.0
        %1837 = vadd.xlane.f32.xlu0 %v1836
        %v1838 = vpop.xlane.xlu0 %1837
        %v1839 = vrcp.pop 10.0
        %v1840 = vmul.f32 %v1835, %v1839
        %v1841 = vmul.f32 %v1838, %v1839
        %v1842 = vsub.f32 %v1840, %v968
        %v1843 = vsub.f32 %v1841, %v969
        %v1844 = vadd.f32 %v968, 1e-08
        %v1845 = vadd.f32 %v969, 1e-08
        %1848 = vrot.lane.b32.xlu0 %v1844, 1
        %v1849 = vpop.permute.xlu0 %1848
        %1850 = vrot.lane.b32.xlu0 %v1845, 1
        %v1851 = vpop.permute.xlu0 %1850
        %v1854 = vrcp.pop %v1849
        %v1855 = vmul.f32 %v1842, %v1854
        %v1856 = vrcp.pop %v1851
        %v1857 = vmul.f32 %v1843, %v1856
        %v1858 = vld [vmem:[%s14] sm:$0xff]
        %v1859 = vld [vmem:[%s14 + $0x8] sm:$0xff]
        %v1860 = vld [vmem:[%s15] sm:$0x1]
        %1862 = vset.pattern.permute.xlu0 6
        %1863 = vperm.xlu0 %1862, %v1855
        %v1864 = vpop.permute.xlu0 %1863
        %1867 = vset.pattern.permute.xlu0 6
        %1868 = vperm.xlu0 %1867, %v1857
        %v1869 = vpop.permute.xlu0 %1868
        %v1872 = vlaneseq
        %v1873 = vshrl.u32 %v1872, 7
        %v1874 = vsub.s32 0, %v1873
        %v1875 = vrot.slane %v1860, %v1874
        %v1877 = vmul.f32 %v1864, %v1875
        %v1878 = vmul.f32 %v1869, %v1875
        %v1880 = vsel %vm1604, %v1826, 0
        %v1883 = vsel %vm1604, %v1827, 0
        %1885 = vmatprep.subr.mxu0 0.0
        %1886 = vmatpush1.msra.mxu0 %v1858
        %1887 = vmatprep.subr.mxu0 0.0
        %1888 = vmatpush1.msra.mxu0 %v1859
        %1889 = vmatprep.subr.mxu0 0.0
        %1890 = vmatpush1.msra.mxu0 0.0
        %1891 = vmatprep.subr.mxu0 0.0
        %1892 = vmatpush1.msra.mxu0 0.0
        %1893 = vmatprep.subr.mxu0 0.0
        %1894 = vmatpush1.msra.mxu0 0.0
        %1895 = vmatprep.subr.mxu0 0.0
        %1896 = vmatpush1.msra.mxu0 0.0
        %1897 = vmatprep.subr.mxu0 0.0
        %1898 = vmatpush1.msra.mxu0 0.0
        %1899 = vmatprep.subr.mxu0 0.0
        %1900 = vmatpush1.msra.mxu0 0.0
        %1901 = vmatprep.subr.mxu0 0.0
        %1902 = vmatpush1.msra.mxu0 0.0
        %1903 = vmatprep.subr.mxu0 0.0
        %1904 = vmatpush1.msra.mxu0 0.0
        %1905 = vmatprep.subr.mxu0 0.0
        %1906 = vmatpush1.msra.mxu0 0.0
        %1907 = vmatprep.subr.mxu0 0.0
        %1908 = vmatpush1.msra.mxu0 0.0
        %1909 = vmatprep.subr.mxu0 0.0
        %1910 = vmatpush1.msra.mxu0 0.0
        %1911 = vmatprep.subr.mxu0 0.0
        %1912 = vmatpush1.msra.mxu0 0.0
        %1913 = vmatprep.subr.mxu0 0.0
        %1914 = vmatpush1.msra.mxu0 0.0
        %1915 = vmatprep.subr.mxu0 0.0
        %1916 = vmatpush1.msra.mxu0 0.0
        %1917 = vmatprep.subr.mxu0 0.0
        %1918 = vmatpush1.msra.mxu0 0.0
        %1919 = vmatprep.subr.mxu0 0.0
        %1920 = vmatpush1.msra.mxu0 0.0
        %1921 = vmatprep.subr.mxu0 0.0
        %1922 = vmatpush1.msra.mxu0 0.0
        %1923 = vmatprep.subr.mxu0 0.0
        %1924 = vmatpush1.msra.mxu0 0.0
        %1925 = vmatprep.subr.mxu0 0.0
        %1926 = vmatpush1.msra.mxu0 0.0
        %1927 = vmatprep.subr.mxu0 0.0
        %1928 = vmatpush1.msra.mxu0 0.0
        %1929 = vmatprep.subr.mxu0 0.0
        %1930 = vmatpush1.msra.mxu0 0.0
        %1931 = vmatprep.subr.mxu0 0.0
        %1932 = vmatpush1.msra.mxu0 0.0
        %1933 = vmatprep.subr.mxu0 0.0
        %1934 = vmatpush1.msra.mxu0 0.0
        %1935 = vmatprep.subr.mxu0 0.0
        %1936 = vmatpush1.msra.mxu0 0.0
        %1937 = vmatprep.subr.mxu0 0.0
        %1938 = vmatpush1.msra.mxu0 0.0
        %1939 = vmatprep.subr.mxu0 0.0
        %1940 = vmatpush1.msra.mxu0 0.0
        %1941 = vmatprep.subr.mxu0 0.0
        %1942 = vmatpush1.msra.mxu0 0.0
        %1943 = vmatprep.subr.mxu0 0.0
        %1944 = vmatpush1.msra.mxu0 0.0
        %1945 = vmatprep.subr.mxu0 0.0
        %1946 = vmatpush1.msra.mxu0 0.0
        %1947 = vmatprep.subr.mxu0 0.0
        %1948 = vmatpush1.msra.mxu0 0.0
        %1949 = vmatprep.mubr.f32.mxu0 0.0
        %1950 = vmatmul.mubr.f32.gmra.mrb[0].mxu0 %v1880
        %v1951 = vpop.f32.mrb[0].mxu0
        %v1952 = vadd.f32 %v1877, %v1951
        %v1953 = vpop.f32.mrb[0].mxu0
        %1954 = vmatprep.mubr.f32.mxu0 0.0
        %1955 = vmatmul.mubr.f32.gmra.mrb[0].mxu0 %v1883
        %v1956 = vpop.f32.mrb[0].mxu0
        %v1957 = vadd.f32 %v1878, %v1956
        %v1958 = vpop.f32.mrb[0].mxu0
        %1959 = vdwg.mxu0
        %1960 = vst.msk [vmem:[%s906] sm:$0xff] %vm1604, %v1952
        %1961 = vst.msk [vmem:[%s906 + $0x8] sm:$0xff] %vm1604, %v1957
        %1962 = vset.pattern.permute.xlu0 5
        %1963 = vperm.xlu0 %1962, %v968
        %v1964 = vpop.permute.xlu0 %1963
        %1966 = vset.pattern.permute.xlu0 5
        %1967 = vperm.xlu0 %1966, %v969
        %v1968 = vpop.permute.xlu0 %1967
        %v1970 = vmul.f32 %v1964, %v1952
        %v1971 = vmul.f32 %v1968, %v1957
        %1972 = vset.pattern.permute.xlu0 6
        %1973 = vperm.xlu0 %1972, %v968
        %v1974 = vpop.permute.xlu0 %1973
        %1976 = vset.pattern.permute.xlu0 6
        %1977 = vperm.xlu0 %1976, %v969
        %v1978 = vpop.permute.xlu0 %1977
        %v1980 = vadd.f32 %v1970, %v1974
        %v1981 = vadd.f32 %v1971, %v1978
        %1982 = vst.msk [vmem:[%s913] sm:$0xff] %vm1604, %v1980
        %1983 = vst.msk [vmem:[%s913 + $0x8] sm:$0xff] %vm1604, %v1981
        %s1984 = sand.u32 %s428, 1
        %s1985 = scalar_lea.sflag [#allocation4], %s1984
        %s1986 = sand.u32 %s428, 1
        %s1987 = smul.addr %s1986, 16
        %s1988 = scalar_lea.vmem [#allocation8], %s1987
        %s1989 = sand.u32 %s59, 1
        %s1990 = scalar_lea.sflag [#allocation10], %s1989
        %s1991 = sand.u32 %s454, 1
        %s1992 = smul.addr %s1991, 16
        %s1993 = scalar_lea.vmem [#allocation9], %s1992
        %s1994 = sand.u32 %s59, 1
        %s1995 = scalar_lea.sflag [#allocation10], %s1994
        %s1996 = sand.u32 %s480, 1
        %s1997 = smul.addr %s1996, 16
        %s1998 = scalar_lea.vmem [#allocation11], %s1997
        %s1999 = sand.u32 %s59, 1
        %s2000 = scalar_lea.sflag [#allocation13], %s1999
        %s2001 = sand.u32 %s506, 1
        %s2002 = smul.addr %s2001, 16
        %s2003 = scalar_lea.vmem [#allocation12], %s2002
        %s2004 = sand.u32 %s59, 1
        %s2005 = scalar_lea.sflag [#allocation13], %s2004
        %s2006 = sand.u32 %s532, 1
        %s2007 = smul.addr %s2006, 16
        %s2008 = scalar_lea.vmem [#allocation14], %s2007
        %s2009 = sand.u32 %s59, 1
        %s2010 = scalar_lea.sflag [#allocation16], %s2009
        %s2011 = sand.u32 %s558, 1
        %s2012 = smul.addr %s2011, 16
        %s2013 = scalar_lea.vmem [#allocation15], %s2012
        %s2014 = sand.u32 %s59, 1
        %s2015 = scalar_lea.sflag [#allocation16], %s2014
        %s2016 = sand.u32 %s584, 1
        %s2017 = smul.addr %s2016, 16
        %s2018 = scalar_lea.vmem [#allocation17], %s2017
        %s2019 = sand.u32 %s59, 1
        %s2020 = scalar_lea.sflag [#allocation19], %s2019
        %s2021 = sand.u32 %s610, 1
        %s2022 = smul.addr %s2021, 16
        %s2023 = scalar_lea.vmem [#allocation18], %s2022
        %s2024 = sand.u32 %s59, 1
        %s2025 = scalar_lea.sflag [#allocation19], %s2024
        %s2026 = sand.u32 %s636, 1
        %s2027 = smul.addr %s2026, 16
        %s2028 = scalar_lea.vmem [#allocation20], %s2027
        %s2029 = sand.u32 %s662, 1
        %s2030 = scalar_lea.sflag [#allocation22], %s2029
        %s2031 = sand.u32 %s662, 1
        %s2032 = smul.addr %s2031, 16
        %s2033 = scalar_lea.vmem [#allocation21], %s2032
        // Predicated region
        $region97: #{worm_vae_forward.1} parent=83 // pred_check
          %p2034 = pneg %p438
        $region98: #{worm_vae_forward.1} parent=83 // pred_check_branch
          %2036 = sbr.rel (%p2034) target = $region100
        $region99: #{worm_vae_forward.1} parent=83 // pred_region
          %s2038 = ssub.s32 256, 256
          %2039 = vsyncadd %s1985, %s2038
          %s2040 = smul.addr %s59, 2
          %s2041 = smul.addr %s2040, 128
          %s2042 = scalar_lea.hbm %s16, %s2041
          %s2043 = sshll.u32 %s1988, 4
          %s2044 = int_to_ptr.vmem [resolvable:$true] %s2043
          %2049 = dma.vmem_to_hbm [thread:$0]  %s2044, 256, %s2042, %s1985, 128, 128, 8
        $region100: #{worm_vae_forward.1} parent=83 // pred_fallthru
          _
        // Predicated region
        $region101: #{worm_vae_forward.1} parent=83 // pred_check
          %p2050 = pneg %p464
        $region102: #{worm_vae_forward.1} parent=83 // pred_check_branch
          %2052 = sbr.rel (%p2050) target = $region104
        $region103: #{worm_vae_forward.1} parent=83 // pred_region
          %s2054 = ssub.s32 256, 256
          %2055 = vsyncadd %s1990, %s2054
          %s2056 = smul.addr %s59, 2
          %s2057 = smul.addr %s2056, 128
          %s2058 = scalar_lea.hbm %s17, %s2057
          %s2059 = sshll.u32 %s1993, 4
          %s2060 = int_to_ptr.vmem [resolvable:$true] %s2059
          %2065 = dma.vmem_to_hbm [thread:$0]  %s2060, 256, %s2058, %s1990, 128, 128, 8
        $region104: #{worm_vae_forward.1} parent=83 // pred_fallthru
          _
        // Predicated region
        $region105: #{worm_vae_forward.1} parent=83 // pred_check
          %p2066 = pneg %p490
        $region106: #{worm_vae_forward.1} parent=83 // pred_check_branch
          %2068 = sbr.rel (%p2066) target = $region108
        $region107: #{worm_vae_forward.1} parent=83 // pred_region
          %s2070 = ssub.s32 256, 256
          %2071 = vsyncadd %s1995, %s2070
          %s2072 = smul.addr %s59, 2
          %s2073 = smul.addr %s2072, 128
          %s2074 = scalar_lea.hbm %s18, %s2073
          %s2075 = sshll.u32 %s1998, 4
          %s2076 = int_to_ptr.vmem [resolvable:$true] %s2075
          %2081 = dma.vmem_to_hbm [thread:$0]  %s2076, 256, %s2074, %s1995, 128, 128, 8
        $region108: #{worm_vae_forward.1} parent=83 // pred_fallthru
          _
        // Predicated region
        $region109: #{worm_vae_forward.1} parent=83 // pred_check
          %p2082 = pneg %p516
        $region110: #{worm_vae_forward.1} parent=83 // pred_check_branch
          %2084 = sbr.rel (%p2082) target = $region112
        $region111: #{worm_vae_forward.1} parent=83 // pred_region
          %s2086 = ssub.s32 256, 256
          %2087 = vsyncadd %s2000, %s2086
          %s2088 = smul.addr %s59, 2
          %s2089 = smul.addr %s2088, 128
          %s2090 = scalar_lea.hbm %s19, %s2089
          %s2091 = sshll.u32 %s2003, 4
          %s2092 = int_to_ptr.vmem [resolvable:$true] %s2091
          %2097 = dma.vmem_to_hbm [thread:$0]  %s2092, 256, %s2090, %s2000, 128, 128, 8
        $region112: #{worm_vae_forward.1} parent=83 // pred_fallthru
          _
        // Predicated region
        $region113: #{worm_vae_forward.1} parent=83 // pred_check
          %p2098 = pneg %p542
        $region114: #{worm_vae_forward.1} parent=83 // pred_check_branch
          %2100 = sbr.rel (%p2098) target = $region116
        $region115: #{worm_vae_forward.1} parent=83 // pred_region
          %s2102 = ssub.s32 256, 256
          %2103 = vsyncadd %s2005, %s2102
          %s2104 = smul.addr %s59, 2
          %s2105 = smul.addr %s2104, 128
          %s2106 = scalar_lea.hbm %s20, %s2105
          %s2107 = sshll.u32 %s2008, 4
          %s2108 = int_to_ptr.vmem [resolvable:$true] %s2107
          %2113 = dma.vmem_to_hbm [thread:$0]  %s2108, 256, %s2106, %s2005, 128, 128, 8
        $region116: #{worm_vae_forward.1} parent=83 // pred_fallthru
          _
        // Predicated region
        $region117: #{worm_vae_forward.1} parent=83 // pred_check
          %p2114 = pneg %p568
        $region118: #{worm_vae_forward.1} parent=83 // pred_check_branch
          %2116 = sbr.rel (%p2114) target = $region120
        $region119: #{worm_vae_forward.1} parent=83 // pred_region
          %s2118 = ssub.s32 256, 256
          %2119 = vsyncadd %s2010, %s2118
          %s2120 = smul.addr %s59, 2
          %s2121 = smul.addr %s2120, 128
          %s2122 = scalar_lea.hbm %s21, %s2121
          %s2123 = sshll.u32 %s2013, 4
          %s2124 = int_to_ptr.vmem [resolvable:$true] %s2123
          %2129 = dma.vmem_to_hbm [thread:$0]  %s2124, 256, %s2122, %s2010, 128, 128, 8
        $region120: #{worm_vae_forward.1} parent=83 // pred_fallthru
          _
        // Predicated region
        $region121: #{worm_vae_forward.1} parent=83 // pred_check
          %p2130 = pneg %p594
        $region122: #{worm_vae_forward.1} parent=83 // pred_check_branch
          %2132 = sbr.rel (%p2130) target = $region124
        $region123: #{worm_vae_forward.1} parent=83 // pred_region
          %s2134 = ssub.s32 256, 256
          %2135 = vsyncadd %s2015, %s2134
          %s2136 = smul.addr %s59, 2
          %s2137 = smul.addr %s2136, 128
          %s2138 = scalar_lea.hbm %s22, %s2137
          %s2139 = sshll.u32 %s2018, 4
          %s2140 = int_to_ptr.vmem [resolvable:$true] %s2139
          %2145 = dma.vmem_to_hbm [thread:$0]  %s2140, 256, %s2138, %s2015, 128, 128, 8
        $region124: #{worm_vae_forward.1} parent=83 // pred_fallthru
          _
        // Predicated region
        $region125: #{worm_vae_forward.1} parent=83 // pred_check
          %p2146 = pneg %p620
        $region126: #{worm_vae_forward.1} parent=83 // pred_check_branch
          %2148 = sbr.rel (%p2146) target = $region128
        $region127: #{worm_vae_forward.1} parent=83 // pred_region
          %s2150 = ssub.s32 256, 256
          %2151 = vsyncadd %s2020, %s2150
          %s2152 = smul.addr %s59, 2
          %s2153 = smul.addr %s2152, 128
          %s2154 = scalar_lea.hbm %s23, %s2153
          %s2155 = sshll.u32 %s2023, 4
          %s2156 = int_to_ptr.vmem [resolvable:$true] %s2155
          %2161 = dma.vmem_to_hbm [thread:$0]  %s2156, 256, %s2154, %s2020, 128, 128, 8
        $region128: #{worm_vae_forward.1} parent=83 // pred_fallthru
          _
        // Predicated region
        $region129: #{worm_vae_forward.1} parent=83 // pred_check
          %p2162 = pneg %p646
        $region130: #{worm_vae_forward.1} parent=83 // pred_check_branch
          %2164 = sbr.rel (%p2162) target = $region132
        $region131: #{worm_vae_forward.1} parent=83 // pred_region
          %s2166 = ssub.s32 256, 256
          %2167 = vsyncadd %s2025, %s2166
          %s2168 = smul.addr %s59, 2
          %s2169 = smul.addr %s2168, 128
          %s2170 = scalar_lea.hbm %s24, %s2169
          %s2171 = sshll.u32 %s2028, 4
          %s2172 = int_to_ptr.vmem [resolvable:$true] %s2171
          %2177 = dma.vmem_to_hbm [thread:$0]  %s2172, 256, %s2170, %s2025, 128, 128, 8
        $region132: #{worm_vae_forward.1} parent=83 // pred_fallthru
          _
        // Predicated region
        $region133: #{worm_vae_forward.1} parent=83 // pred_check
          %p2178 = pneg %p672
        $region134: #{worm_vae_forward.1} parent=83 // pred_check_branch
          %2180 = sbr.rel (%p2178) target = $region136
        $region135: #{worm_vae_forward.1} parent=83 // pred_region
          %s2182 = ssub.s32 256, 256
          %2183 = vsyncadd %s2030, %s2182
          %s2184 = smul.addr %s59, 2
          %s2185 = smul.addr %s2184, 128
          %s2186 = scalar_lea.hbm %s25, %s2185
          %s2187 = sshll.u32 %s2033, 4
          %s2188 = int_to_ptr.vmem [resolvable:$true] %s2187
          %2193 = dma.vmem_to_hbm [thread:$0]  %s2188, 256, %s2186, %s2030, 128, 128, 8
        $region136: #{worm_vae_forward.1} parent=83 // pred_fallthru
          _
      $region84: #{worm_vae_forward.1} parent=5 // pred_fallthru
        _
      %p2194 = scmp.le.s32.totalorder 2, %s54
      // Predicated region
      $region137: #{worm_vae_forward.1} parent=5 // pred_check
        %p2195 = pneg %p2194
      $region138: #{worm_vae_forward.1} parent=5 // pred_check_branch
        %2197 = sbr.rel (%p2195) target = $region140
      $region139: #{worm_vae_forward.1} parent=5 // pred_region
        %s2198 = ssub.s32 %s54, 2
        // Predicated region
        $region141: #{worm_vae_forward.1} parent=139 // pred_check
          %p2199 = pneg %p444
        $region142: #{worm_vae_forward.1} parent=139 // pred_check_branch
          %2201 = sbr.rel (%p2199) target = $region144
        $region143: #{worm_vae_forward.1} parent=139 // pred_region
          %s2202 = sand.u32 %s429, 1
          %s2203 = scalar_lea.sflag [#allocation4], %s2202
          %s2204 = sand.u32 %s429, 1
          %s2205 = smul.addr %s2204, 16
          %s2206 = scalar_lea.vmem [#allocation8], %s2205
          %2207 = dma.done %s2203, 256
        $region144: #{worm_vae_forward.1} parent=139 // pred_fallthru
          _
        // Predicated region
        $region145: #{worm_vae_forward.1} parent=139 // pred_check
          %p2208 = pneg %p470
        $region146: #{worm_vae_forward.1} parent=139 // pred_check_branch
          %2210 = sbr.rel (%p2208) target = $region148
        $region147: #{worm_vae_forward.1} parent=139 // pred_region
          %s2211 = sand.u32 %s60, 1
          %s2212 = scalar_lea.sflag [#allocation10], %s2211
          %s2213 = sand.u32 %s455, 1
          %s2214 = smul.addr %s2213, 16
          %s2215 = scalar_lea.vmem [#allocation9], %s2214
          %2216 = dma.done %s2212, 256
        $region148: #{worm_vae_forward.1} parent=139 // pred_fallthru
          _
        // Predicated region
        $region149: #{worm_vae_forward.1} parent=139 // pred_check
          %p2217 = pneg %p496
        $region150: #{worm_vae_forward.1} parent=139 // pred_check_branch
          %2219 = sbr.rel (%p2217) target = $region152
        $region151: #{worm_vae_forward.1} parent=139 // pred_region
          %s2220 = sand.u32 %s60, 1
          %s2221 = scalar_lea.sflag [#allocation10], %s2220
          %s2222 = sand.u32 %s481, 1
          %s2223 = smul.addr %s2222, 16
          %s2224 = scalar_lea.vmem [#allocation11], %s2223
          %2225 = dma.done %s2221, 256
        $region152: #{worm_vae_forward.1} parent=139 // pred_fallthru
          _
        // Predicated region
        $region153: #{worm_vae_forward.1} parent=139 // pred_check
          %p2226 = pneg %p522
        $region154: #{worm_vae_forward.1} parent=139 // pred_check_branch
          %2228 = sbr.rel (%p2226) target = $region156
        $region155: #{worm_vae_forward.1} parent=139 // pred_region
          %s2229 = sand.u32 %s60, 1
          %s2230 = scalar_lea.sflag [#allocation13], %s2229
          %s2231 = sand.u32 %s507, 1
          %s2232 = smul.addr %s2231, 16
          %s2233 = scalar_lea.vmem [#allocation12], %s2232
          %2234 = dma.done %s2230, 256
        $region156: #{worm_vae_forward.1} parent=139 // pred_fallthru
          _
        // Predicated region
        $region157: #{worm_vae_forward.1} parent=139 // pred_check
          %p2235 = pneg %p548
        $region158: #{worm_vae_forward.1} parent=139 // pred_check_branch
          %2237 = sbr.rel (%p2235) target = $region160
        $region159: #{worm_vae_forward.1} parent=139 // pred_region
          %s2238 = sand.u32 %s60, 1
          %s2239 = scalar_lea.sflag [#allocation13], %s2238
          %s2240 = sand.u32 %s533, 1
          %s2241 = smul.addr %s2240, 16
          %s2242 = scalar_lea.vmem [#allocation14], %s2241
          %2243 = dma.done %s2239, 256
        $region160: #{worm_vae_forward.1} parent=139 // pred_fallthru
          _
        // Predicated region
        $region161: #{worm_vae_forward.1} parent=139 // pred_check
          %p2244 = pneg %p574
        $region162: #{worm_vae_forward.1} parent=139 // pred_check_branch
          %2246 = sbr.rel (%p2244) target = $region164
        $region163: #{worm_vae_forward.1} parent=139 // pred_region
          %s2247 = sand.u32 %s60, 1
          %s2248 = scalar_lea.sflag [#allocation16], %s2247
          %s2249 = sand.u32 %s559, 1
          %s2250 = smul.addr %s2249, 16
          %s2251 = scalar_lea.vmem [#allocation15], %s2250
          %2252 = dma.done %s2248, 256
        $region164: #{worm_vae_forward.1} parent=139 // pred_fallthru
          _
        // Predicated region
        $region165: #{worm_vae_forward.1} parent=139 // pred_check
          %p2253 = pneg %p600
        $region166: #{worm_vae_forward.1} parent=139 // pred_check_branch
          %2255 = sbr.rel (%p2253) target = $region168
        $region167: #{worm_vae_forward.1} parent=139 // pred_region
          %s2256 = sand.u32 %s60, 1
          %s2257 = scalar_lea.sflag [#allocation16], %s2256
          %s2258 = sand.u32 %s585, 1
          %s2259 = smul.addr %s2258, 16
          %s2260 = scalar_lea.vmem [#allocation17], %s2259
          %2261 = dma.done %s2257, 256
        $region168: #{worm_vae_forward.1} parent=139 // pred_fallthru
          _
        // Predicated region
        $region169: #{worm_vae_forward.1} parent=139 // pred_check
          %p2262 = pneg %p626
        $region170: #{worm_vae_forward.1} parent=139 // pred_check_branch
          %2264 = sbr.rel (%p2262) target = $region172
        $region171: #{worm_vae_forward.1} parent=139 // pred_region
          %s2265 = sand.u32 %s60, 1
          %s2266 = scalar_lea.sflag [#allocation19], %s2265
          %s2267 = sand.u32 %s611, 1
          %s2268 = smul.addr %s2267, 16
          %s2269 = scalar_lea.vmem [#allocation18], %s2268
          %2270 = dma.done %s2266, 256
        $region172: #{worm_vae_forward.1} parent=139 // pred_fallthru
          _
        // Predicated region
        $region173: #{worm_vae_forward.1} parent=139 // pred_check
          %p2271 = pneg %p652
        $region174: #{worm_vae_forward.1} parent=139 // pred_check_branch
          %2273 = sbr.rel (%p2271) target = $region176
        $region175: #{worm_vae_forward.1} parent=139 // pred_region
          %s2274 = sand.u32 %s60, 1
          %s2275 = scalar_lea.sflag [#allocation19], %s2274
          %s2276 = sand.u32 %s637, 1
          %s2277 = smul.addr %s2276, 16
          %s2278 = scalar_lea.vmem [#allocation20], %s2277
          %2279 = dma.done %s2275, 256
        $region176: #{worm_vae_forward.1} parent=139 // pred_fallthru
          _
        // Predicated region
        $region177: #{worm_vae_forward.1} parent=139 // pred_check
          %p2280 = pneg %p678
        $region178: #{worm_vae_forward.1} parent=139 // pred_check_branch
          %2282 = sbr.rel (%p2280) target = $region180
        $region179: #{worm_vae_forward.1} parent=139 // pred_region
          %s2283 = sand.u32 %s663, 1
          %s2284 = scalar_lea.sflag [#allocation22], %s2283
          %s2285 = sand.u32 %s663, 1
          %s2286 = smul.addr %s2285, 16
          %s2287 = scalar_lea.vmem [#allocation21], %s2286
          %2288 = dma.done %s2284, 256
        $region180: #{worm_vae_forward.1} parent=139 // pred_fallthru
          _
      $region140: #{worm_vae_forward.1} parent=5 // pred_fallthru
        _
    $region6: #{worm_vae_forward.1} parent=1 // loop_footer
      %s58 = sadd.s32 1, %s54
    $region7: #{worm_vae_forward.1} parent=1 // loop_footer_branch
      %53 = sbr.rel target = $region3
    $region8: #{worm_vae_forward.1} parent=1 // loop_exit
      _
    %2289 = vsyncpa [#allocation3], 1
    %s2290 = scalar_lea.sflag [#allocation3], 1
    %2291 = vsyncpa %s2290, 1
    %2292 = vsyncpa [#allocation6], 1
    %2293 = vsyncpa [#allocation4], 1
    %s2294 = scalar_lea.sflag [#allocation4], 1
    %2295 = vsyncpa %s2294, 1
    %2296 = vsyncpa [#allocation10], 1
    %s2297 = scalar_lea.sflag [#allocation10], 1
    %2298 = vsyncpa %s2297, 1
    %2299 = vsyncpa [#allocation13], 1
    %s2300 = scalar_lea.sflag [#allocation13], 1
    %2301 = vsyncpa %s2300, 1
    %2302 = vsyncpa [#allocation16], 1
    %s2303 = scalar_lea.sflag [#allocation16], 1
    %2304 = vsyncpa %s2303, 1
    %2305 = vsyncpa [#allocation19], 1
    %s2306 = scalar_lea.sflag [#allocation19], 1
    %2307 = vsyncpa %s2306, 1
    %2308 = vsyncpa [#allocation22], 1
    %s2309 = scalar_lea.sflag [#allocation22], 1
    %2310 = vsyncpa %s2309, 1

</llo_original>
